<compile_context>
chip_gen: v7x
topology: tpu7x:2x2x1
jax: 0.10.0
libtpu: 0.0.40
codegen_flags: <defaults>
</compile_context>

<pallas_src>
import functools
import math

import jax
import jax.numpy as jnp
from jax.experimental import pallas as pl
from jax.experimental.pallas import tpu as pltpu


def _mha_kernel(x_ref, wqkv_ref, wp_ref, bp_ref, out_ref, *, B, T, H, HS, C):
    # x_ref:    (B*T, C)   batch/seq folded onto sublanes
    # wqkv_ref: (C, 3C)    [Wq^T * (1/sqrt(C)) | Wk^T | Wv^T]; column h*HS+d = head h, dim d
    # wp_ref:   (C, C)     Wp^T (pre-transposed in the wrapper)
    # bp_ref:   (1, C)
    # out_ref:  (B*T, C)
    dt = x_ref.dtype                        # MXU operand dtype (bf16-friendly)

    x = x_ref[...]                          # (B*T, C)
    # Fused QKV: one lane-dense (B*T, C) @ (C, 3C) matmul, f32 accumulation.
    qkv = jnp.dot(x, wqkv_ref[...], preferred_element_type=jnp.float32)   # (B*T, 3C)
    qkv = qkv.astype(dt)                    # single hoisted cast (not 3*H per-slice casts)

    wp = wp_ref[...]                        # (C, C) held once for the whole loop
    acc = jnp.zeros((B * T, C), jnp.float32)

    for h in range(H):                      # static unroll: attention only, no weight reloads
        q = qkv[:, h * HS:(h + 1) * HS].reshape(B, T, HS)            # already scaled via Wq
        k = qkv[:, C + h * HS:C + (h + 1) * HS].reshape(B, T, HS)
        v = qkv[:, 2 * C + h * HS:2 * C + (h + 1) * HS].reshape(B, T, HS)

        # Batched over B with a single batch dim (no in-kernel transposes).
        s = jnp.einsum('bqd,bkd->bqk', q, k,
                       preferred_element_type=jnp.float32)           # (B, T, T)
        s = s - jnp.max(s, axis=-1, keepdims=True)
        p = jnp.exp(s)
        wei = (p / jnp.sum(p, axis=-1, keepdims=True)).astype(dt)    # exact softmax, f32 math
        o = jnp.einsum('bqk,bkd->bqd', wei, v,
                       preferred_element_type=jnp.float32)           # (B, T, HS)

        # Distribute the output projection over heads: no 8-lane masked stores,
        # no concat slab, no second full-slab read. acc stays f32.
        o2 = o.reshape(B * T, HS).astype(dt)
        acc = acc + jnp.dot(o2, wp[h * HS:(h + 1) * HS, :],
                            preferred_element_type=jnp.float32)      # (B*T, C)

    out_ref[...] = (acc + bp_ref[...]).astype(out_ref.dtype)         # one lane-dense store


def multi_head_attention(x, wq, wk, wv, wp, bp):
    """x: (B, T, C); wq/wk/wv: (H, HS, C) (PyTorch Linear (out,in) layout);
    wp: (C, C); bp: (C,)."""
    B, T, C = x.shape
    H, HS, Cin = wq.shape
    assert Cin == C and H * HS == C, "num_heads * head_size must equal num_embedding"

    # Wrapper-side layout plumbing (one-time, trace-level, free for the kernel):
    # pre-transpose the (out, in) Linear weights to (in, out), fold the module's
    # 1/sqrt(C) (num_embedding!) softmax scale into Wq, and stack Q|K|V into a
    # single lane-dense (C, 3C) slab; each third's column h*HS+d is head h,
    # dim d, matching the torch.cat(head_outs, -1) layout.
    scale = 1.0 / math.sqrt(C)                            # module divides by C**0.5
    wq_t = wq.reshape(C, C).T * scale
    wk_t = wk.reshape(C, C).T
    wv_t = wv.reshape(C, C).T
    wqkv = jnp.concatenate([wq_t, wk_t, wv_t], axis=1)    # (C, 3C)
    wp_t = wp.T                                           # (C, C): proj = cat @ Wp.T
    bp2 = bp.reshape(1, C).astype(jnp.float32)
    x2d = x.reshape(B * T, C)                             # fold B, T onto sublanes

    kernel = functools.partial(_mha_kernel, B=B, T=T, H=H, HS=HS, C=C)
    out2d = pl.pallas_call(
        kernel,
        out_shape=jax.ShapeDtypeStruct((B * T, C), x.dtype),
        grid=(1,),
        in_specs=[
            pl.BlockSpec((B * T, C), lambda i: (0, 0)),       # x (folded)
            pl.BlockSpec((C, 3 * C), lambda i: (0, 0)),       # stacked [Wq*s|Wk|Wv]^T
            pl.BlockSpec((C, C), lambda i: (0, 0)),           # Wp^T
            pl.BlockSpec((1, C), lambda i: (0, 0)),           # bias
        ],
        out_specs=pl.BlockSpec((B * T, C), lambda i: (0, 0)),
        compiler_params=pltpu.CompilerParams(
            dimension_semantics=("arbitrary",)),
    )(x2d, wqkv, wp_t, bp2)
    return out2d.reshape(B, T, C)


def _reference(x, wq, wk, wv, wp, bp):
    """Plain-JAX reference mirroring the PyTorch forward (eval mode)."""
    B, T, C = x.shape
    H = wq.shape[0]
    outs = []
    for h in range(H):
        q = x @ wq[h].T
        k = x @ wk[h].T
        v = x @ wv[h].T
        wei = jax.nn.softmax((q @ jnp.swapaxes(k, -2, -1)) / (C ** 0.5), axis=-1)
        outs.append(wei @ v)
    cat = jnp.concatenate(outs, axis=-1)
    return cat @ wp.T + bp


if __name__ == "__main__":
    # Small shapes consistent with the module: num_heads * head_size == num_embedding.
    B, T = 2, 8
    num_heads, head_size = 4, 8
    num_embedding = num_heads * head_size  # 32

    key = jax.random.PRNGKey(0)
    kx, kq, kk, kv, kp, kb = jax.random.split(key, 6)

    x = jax.random.normal(kx, (B, T, num_embedding), dtype=jnp.float32)
    # Deterministic synthetic parameters (PyTorch Linear weight layout (out, in)).
    s = 1.0 / math.sqrt(num_embedding)
    wq = jax.random.uniform(kq, (num_heads, head_size, num_embedding),
                            minval=-s, maxval=s, dtype=jnp.float32)
    wk = jax.random.uniform(kk, (num_heads, head_size, num_embedding),
                            minval=-s, maxval=s, dtype=jnp.float32)
    wv = jax.random.uniform(kv, (num_heads, head_size, num_embedding),
                            minval=-s, maxval=s, dtype=jnp.float32)
    wp = jax.random.uniform(kp, (num_embedding, num_embedding),
                            minval=-s, maxval=s, dtype=jnp.float32)
    bp = jax.random.uniform(kb, (num_embedding,),
                            minval=-s, maxval=s, dtype=jnp.float32)

    out = multi_head_attention(x, wq, wk, wv, wp, bp)
    out = jax.block_until_ready(out)

    ref = _reference(x, wq, wk, wv, wp, bp)
    assert out.shape == (B, T, num_embedding)
    # Exact-softmax f32 path: only matmul-ordering / scale-folding roundoff remains.
    assert jnp.allclose(out, ref, atol=1e-4, rtol=1e-4), "mismatch vs reference"

    print("KERNEL_OK")
</pallas_src>

<mosaic_0001>
module attributes {stable_mosaic.version = 11 : i64} {
  func.func @_mha_kernel(%arg0: i32, %arg1: memref<16x32xf32, #tpu.memory_space<vmem>>, %arg2: memref<32x96xf32, #tpu.memory_space<vmem>>, %arg3: memref<32x32xf32, #tpu.memory_space<vmem>>, %arg4: memref<1x32xf32, #tpu.memory_space<vmem>>, %arg5: memref<16x32xf32, #tpu.memory_space<vmem>>) attributes {dimension_semantics = [#tpu.dimension_semantics<arbitrary>], iteration_bounds = array<i64: 1>, scalar_prefetch = 0 : i64, scratch_operands = 0 : i64, tpu.core_type = #tpu.core_type<tc>, window_params = [{pipeline_mode = #tpu.pipeline_mode<synchronous>, transform_indices = @transform_0, window_bounds = array<i64: 16, 32>}, {pipeline_mode = #tpu.pipeline_mode<synchronous>, transform_indices = @transform_1, window_bounds = array<i64: 32, 96>}, {pipeline_mode = #tpu.pipeline_mode<synchronous>, transform_indices = @transform_2, window_bounds = array<i64: 32, 32>}, {pipeline_mode = #tpu.pipeline_mode<synchronous>, transform_indices = @transform_3, window_bounds = array<i64: 1, 32>}, {pipeline_mode = #tpu.pipeline_mode<synchronous>, transform_indices = @transform_4, window_bounds = array<i64: 16, 32>}]} {
    %c0 = arith.constant 0 : index
    %c0_0 = arith.constant 0 : index
    %0 = vector.load %arg1[%c0, %c0_0] : memref<16x32xf32, #tpu.memory_space<vmem>>, vector<16x32xf32>
    %c0_1 = arith.constant 0 : index
    %c0_2 = arith.constant 0 : index
    %1 = vector.load %arg2[%c0_1, %c0_2] : memref<32x96xf32, #tpu.memory_space<vmem>>, vector<32x96xf32>
    %cst = arith.constant dense<0.000000e+00> : vector<16x96xf32>
    %2 = tpu.matmul %0, %1, %cst {dimension_numbers = #tpu.dot_dimension_numbers<[1], [0], [0], [1], [0, 0, 1, 1], [], []>} : vector<16x32xf32>, vector<32x96xf32>, vector<16x96xf32> -> vector<16x96xf32>
    %c0_3 = arith.constant 0 : index
    %c0_4 = arith.constant 0 : index
    %3 = vector.load %arg3[%c0_3, %c0_4] : memref<32x32xf32, #tpu.memory_space<vmem>>, vector<32x32xf32>
    %cst_5 = arith.constant 0.000000e+00 : f32
    %4 = vector.broadcast %cst_5 : f32 to vector<16x32xf32>
    %5 = vector.extract_strided_slice %2 {offsets = [0, 0], sizes = [16, 8], strides = [1, 1]} : vector<16x96xf32> to vector<16x8xf32>
    %6 = vector.shape_cast %5 : vector<16x8xf32> to vector<2x8x8xf32>
    %7 = vector.extract_strided_slice %2 {offsets = [0, 32], sizes = [16, 8], strides = [1, 1]} : vector<16x96xf32> to vector<16x8xf32>
    %8 = vector.shape_cast %7 : vector<16x8xf32> to vector<2x8x8xf32>
    %9 = vector.extract_strided_slice %2 {offsets = [0, 64], sizes = [16, 8], strides = [1, 1]} : vector<16x96xf32> to vector<16x8xf32>
    %10 = vector.shape_cast %9 : vector<16x8xf32> to vector<2x8x8xf32>
    "tpu.trace_start"() <{level = 10 : i32, message = "bqd,bkd->bqk"}> : () -> ()
    %cst_6 = arith.constant dense<0.000000e+00> : vector<2x8x8xf32>
    %11 = tpu.matmul %6, %8, %cst_6 {dimension_numbers = #tpu.dot_dimension_numbers<[2], [2], [1], [1], [0, 0, 0, 1, 1, 1], [0], [0]>} : vector<2x8x8xf32>, vector<2x8x8xf32>, vector<2x8x8xf32> -> vector<2x8x8xf32>
    "tpu.trace_stop"() : () -> ()
    %cst_7 = arith.constant dense<0xFF800000> : vector<2x8xf32>
    %12 = vector.multi_reduction <maximumf>, %11, %cst_7 [2] : vector<2x8x8xf32> to vector<2x8xf32>
    %13 = vector.shape_cast %12 : vector<2x8xf32> to vector<2x8x1xf32>
    %14 = vector.broadcast %13 : vector<2x8x1xf32> to vector<2x8x8xf32>
    %15 = arith.subf %11, %14 : vector<2x8x8xf32>
    %16 = math.exp %15 : vector<2x8x8xf32>
    %cst_8 = arith.constant dense<0.000000e+00> : vector<2x8xf32>
    %17 = vector.multi_reduction <add>, %16, %cst_8 [2] : vector<2x8x8xf32> to vector<2x8xf32>
    %18 = vector.shape_cast %17 : vector<2x8xf32> to vector<2x8x1xf32>
    %19 = vector.broadcast %18 : vector<2x8x1xf32> to vector<2x8x8xf32>
    %20 = arith.divf %16, %19 : vector<2x8x8xf32>
    "tpu.trace_start"() <{level = 10 : i32, message = "bqk,bkd->bqd"}> : () -> ()
    %cst_9 = arith.constant dense<0.000000e+00> : vector<2x8x8xf32>
    %21 = tpu.matmul %20, %10, %cst_9 {dimension_numbers = #tpu.dot_dimension_numbers<[2], [1], [1], [2], [0, 0, 0, 1, 1, 2], [0], [0]>} : vector<2x8x8xf32>, vector<2x8x8xf32>, vector<2x8x8xf32> -> vector<2x8x8xf32>
    "tpu.trace_stop"() : () -> ()
    %22 = vector.shape_cast %21 : vector<2x8x8xf32> to vector<16x8xf32>
    %23 = vector.extract_strided_slice %3 {offsets = [0, 0], sizes = [8, 32], strides = [1, 1]} : vector<32x32xf32> to vector<8x32xf32>
    %cst_10 = arith.constant dense<0.000000e+00> : vector<16x32xf32>
    %24 = tpu.matmul %22, %23, %cst_10 {dimension_numbers = #tpu.dot_dimension_numbers<[1], [0], [0], [1], [0, 0, 1, 1], [], []>} : vector<16x8xf32>, vector<8x32xf32>, vector<16x32xf32> -> vector<16x32xf32>
    %25 = arith.addf %4, %24 : vector<16x32xf32>
    %26 = vector.extract_strided_slice %2 {offsets = [0, 8], sizes = [16, 8], strides = [1, 1]} : vector<16x96xf32> to vector<16x8xf32>
    %27 = vector.shape_cast %26 : vector<16x8xf32> to vector<2x8x8xf32>
    %28 = vector.extract_strided_slice %2 {offsets = [0, 40], sizes = [16, 8], strides = [1, 1]} : vector<16x96xf32> to vector<16x8xf32>
    %29 = vector.shape_cast %28 : vector<16x8xf32> to vector<2x8x8xf32>
    %30 = vector.extract_strided_slice %2 {offsets = [0, 72], sizes = [16, 8], strides = [1, 1]} : vector<16x96xf32> to vector<16x8xf32>
    %31 = vector.shape_cast %30 : vector<16x8xf32> to vector<2x8x8xf32>
    "tpu.trace_start"() <{level = 10 : i32, message = "bqd,bkd->bqk"}> : () -> ()
    %cst_11 = arith.constant dense<0.000000e+00> : vector<2x8x8xf32>
    %32 = tpu.matmul %27, %29, %cst_11 {dimension_numbers = #tpu.dot_dimension_numbers<[2], [2], [1], [1], [0, 0, 0, 1, 1, 1], [0], [0]>} : vector<2x8x8xf32>, vector<2x8x8xf32>, vector<2x8x8xf32> -> vector<2x8x8xf32>
    "tpu.trace_stop"() : () -> ()
    %cst_12 = arith.constant dense<0xFF800000> : vector<2x8xf32>
    %33 = vector.multi_reduction <maximumf>, %32, %cst_12 [2] : vector<2x8x8xf32> to vector<2x8xf32>
    %34 = vector.shape_cast %33 : vector<2x8xf32> to vector<2x8x1xf32>
    %35 = vector.broadcast %34 : vector<2x8x1xf32> to vector<2x8x8xf32>
    %36 = arith.subf %32, %35 : vector<2x8x8xf32>
    %37 = math.exp %36 : vector<2x8x8xf32>
    %cst_13 = arith.constant dense<0.000000e+00> : vector<2x8xf32>
    %38 = vector.multi_reduction <add>, %37, %cst_13 [2] : vector<2x8x8xf32> to vector<2x8xf32>
    %39 = vector.shape_cast %38 : vector<2x8xf32> to vector<2x8x1xf32>
    %40 = vector.broadcast %39 : vector<2x8x1xf32> to vector<2x8x8xf32>
    %41 = arith.divf %37, %40 : vector<2x8x8xf32>
    "tpu.trace_start"() <{level = 10 : i32, message = "bqk,bkd->bqd"}> : () -> ()
    %cst_14 = arith.constant dense<0.000000e+00> : vector<2x8x8xf32>
    %42 = tpu.matmul %41, %31, %cst_14 {dimension_numbers = #tpu.dot_dimension_numbers<[2], [1], [1], [2], [0, 0, 0, 1, 1, 2], [0], [0]>} : vector<2x8x8xf32>, vector<2x8x8xf32>, vector<2x8x8xf32> -> vector<2x8x8xf32>
    "tpu.trace_stop"() : () -> ()
    %43 = vector.shape_cast %42 : vector<2x8x8xf32> to vector<16x8xf32>
    %44 = vector.extract_strided_slice %3 {offsets = [8, 0], sizes = [8, 32], strides = [1, 1]} : vector<32x32xf32> to vector<8x32xf32>
    %cst_15 = arith.constant dense<0.000000e+00> : vector<16x32xf32>
    %45 = tpu.matmul %43, %44, %cst_15 {dimension_numbers = #tpu.dot_dimension_numbers<[1], [0], [0], [1], [0, 0, 1, 1], [], []>} : vector<16x8xf32>, vector<8x32xf32>, vector<16x32xf32> -> vector<16x32xf32>
    %46 = arith.addf %25, %45 : vector<16x32xf32>
    %47 = vector.extract_strided_slice %2 {offsets = [0, 16], sizes = [16, 8], strides = [1, 1]} : vector<16x96xf32> to vector<16x8xf32>
    %48 = vector.shape_cast %47 : vector<16x8xf32> to vector<2x8x8xf32>
    %49 = vector.extract_strided_slice %2 {offsets = [0, 48], sizes = [16, 8], strides = [1, 1]} : vector<16x96xf32> to vector<16x8xf32>
    %50 = vector.shape_cast %49 : vector<16x8xf32> to vector<2x8x8xf32>
    %51 = vector.extract_strided_slice %2 {offsets = [0, 80], sizes = [16, 8], strides = [1, 1]} : vector<16x96xf32> to vector<16x8xf32>
    %52 = vector.shape_cast %51 : vector<16x8xf32> to vector<2x8x8xf32>
    "tpu.trace_start"() <{level = 10 : i32, message = "bqd,bkd->bqk"}> : () -> ()
    %cst_16 = arith.constant dense<0.000000e+00> : vector<2x8x8xf32>
    %53 = tpu.matmul %48, %50, %cst_16 {dimension_numbers = #tpu.dot_dimension_numbers<[2], [2], [1], [1], [0, 0, 0, 1, 1, 1], [0], [0]>} : vector<2x8x8xf32>, vector<2x8x8xf32>, vector<2x8x8xf32> -> vector<2x8x8xf32>
    "tpu.trace_stop"() : () -> ()
    %cst_17 = arith.constant dense<0xFF800000> : vector<2x8xf32>
    %54 = vector.multi_reduction <maximumf>, %53, %cst_17 [2] : vector<2x8x8xf32> to vector<2x8xf32>
    %55 = vector.shape_cast %54 : vector<2x8xf32> to vector<2x8x1xf32>
    %56 = vector.broadcast %55 : vector<2x8x1xf32> to vector<2x8x8xf32>
    %57 = arith.subf %53, %56 : vector<2x8x8xf32>
    %58 = math.exp %57 : vector<2x8x8xf32>
    %cst_18 = arith.constant dense<0.000000e+00> : vector<2x8xf32>
    %59 = vector.multi_reduction <add>, %58, %cst_18 [2] : vector<2x8x8xf32> to vector<2x8xf32>
    %60 = vector.shape_cast %59 : vector<2x8xf32> to vector<2x8x1xf32>
    %61 = vector.broadcast %60 : vector<2x8x1xf32> to vector<2x8x8xf32>
    %62 = arith.divf %58, %61 : vector<2x8x8xf32>
    "tpu.trace_start"() <{level = 10 : i32, message = "bqk,bkd->bqd"}> : () -> ()
    %cst_19 = arith.constant dense<0.000000e+00> : vector<2x8x8xf32>
    %63 = tpu.matmul %62, %52, %cst_19 {dimension_numbers = #tpu.dot_dimension_numbers<[2], [1], [1], [2], [0, 0, 0, 1, 1, 2], [0], [0]>} : vector<2x8x8xf32>, vector<2x8x8xf32>, vector<2x8x8xf32> -> vector<2x8x8xf32>
    "tpu.trace_stop"() : () -> ()
    %64 = vector.shape_cast %63 : vector<2x8x8xf32> to vector<16x8xf32>
    %65 = vector.extract_strided_slice %3 {offsets = [16, 0], sizes = [8, 32], strides = [1, 1]} : vector<32x32xf32> to vector<8x32xf32>
    %cst_20 = arith.constant dense<0.000000e+00> : vector<16x32xf32>
    %66 = tpu.matmul %64, %65, %cst_20 {dimension_numbers = #tpu.dot_dimension_numbers<[1], [0], [0], [1], [0, 0, 1, 1], [], []>} : vector<16x8xf32>, vector<8x32xf32>, vector<16x32xf32> -> vector<16x32xf32>
    %67 = arith.addf %46, %66 : vector<16x32xf32>
    %68 = vector.extract_strided_slice %2 {offsets = [0, 24], sizes = [16, 8], strides = [1, 1]} : vector<16x96xf32> to vector<16x8xf32>
    %69 = vector.shape_cast %68 : vector<16x8xf32> to vector<2x8x8xf32>
    %70 = vector.extract_strided_slice %2 {offsets = [0, 56], sizes = [16, 8], strides = [1, 1]} : vector<16x96xf32> to vector<16x8xf32>
    %71 = vector.shape_cast %70 : vector<16x8xf32> to vector<2x8x8xf32>
    %72 = vector.extract_strided_slice %2 {offsets = [0, 88], sizes = [16, 8], strides = [1, 1]} : vector<16x96xf32> to vector<16x8xf32>
    %73 = vector.shape_cast %72 : vector<16x8xf32> to vector<2x8x8xf32>
    "tpu.trace_start"() <{level = 10 : i32, message = "bqd,bkd->bqk"}> : () -> ()
    %cst_21 = arith.constant dense<0.000000e+00> : vector<2x8x8xf32>
    %74 = tpu.matmul %69, %71, %cst_21 {dimension_numbers = #tpu.dot_dimension_numbers<[2], [2], [1], [1], [0, 0, 0, 1, 1, 1], [0], [0]>} : vector<2x8x8xf32>, vector<2x8x8xf32>, vector<2x8x8xf32> -> vector<2x8x8xf32>
    "tpu.trace_stop"() : () -> ()
    %cst_22 = arith.constant dense<0xFF800000> : vector<2x8xf32>
    %75 = vector.multi_reduction <maximumf>, %74, %cst_22 [2] : vector<2x8x8xf32> to vector<2x8xf32>
    %76 = vector.shape_cast %75 : vector<2x8xf32> to vector<2x8x1xf32>
    %77 = vector.broadcast %76 : vector<2x8x1xf32> to vector<2x8x8xf32>
    %78 = arith.subf %74, %77 : vector<2x8x8xf32>
    %79 = math.exp %78 : vector<2x8x8xf32>
    %cst_23 = arith.constant dense<0.000000e+00> : vector<2x8xf32>
    %80 = vector.multi_reduction <add>, %79, %cst_23 [2] : vector<2x8x8xf32> to vector<2x8xf32>
    %81 = vector.shape_cast %80 : vector<2x8xf32> to vector<2x8x1xf32>
    %82 = vector.broadcast %81 : vector<2x8x1xf32> to vector<2x8x8xf32>
    %83 = arith.divf %79, %82 : vector<2x8x8xf32>
    "tpu.trace_start"() <{level = 10 : i32, message = "bqk,bkd->bqd"}> : () -> ()
    %cst_24 = arith.constant dense<0.000000e+00> : vector<2x8x8xf32>
    %84 = tpu.matmul %83, %73, %cst_24 {dimension_numbers = #tpu.dot_dimension_numbers<[2], [1], [1], [2], [0, 0, 0, 1, 1, 2], [0], [0]>} : vector<2x8x8xf32>, vector<2x8x8xf32>, vector<2x8x8xf32> -> vector<2x8x8xf32>
    "tpu.trace_stop"() : () -> ()
    %85 = vector.shape_cast %84 : vector<2x8x8xf32> to vector<16x8xf32>
    %86 = vector.extract_strided_slice %3 {offsets = [24, 0], sizes = [8, 32], strides = [1, 1]} : vector<32x32xf32> to vector<8x32xf32>
    %cst_25 = arith.constant dense<0.000000e+00> : vector<16x32xf32>
    %87 = tpu.matmul %85, %86, %cst_25 {dimension_numbers = #tpu.dot_dimension_numbers<[1], [0], [0], [1], [0, 0, 1, 1], [], []>} : vector<16x8xf32>, vector<8x32xf32>, vector<16x32xf32> -> vector<16x32xf32>
    %88 = arith.addf %67, %87 : vector<16x32xf32>
    %c0_26 = arith.constant 0 : index
    %c0_27 = arith.constant 0 : index
    %89 = vector.load %arg4[%c0_26, %c0_27] : memref<1x32xf32, #tpu.memory_space<vmem>>, vector<1x32xf32>
    %90 = vector.broadcast %89 : vector<1x32xf32> to vector<16x32xf32>
    %91 = arith.addf %88, %90 : vector<16x32xf32>
    %c0_28 = arith.constant 0 : index
    %c0_29 = arith.constant 0 : index
    %92 = vector.load %arg5[%c0_28, %c0_29] : memref<16x32xf32, #tpu.memory_space<vmem>>, vector<16x32xf32>
    tpu.vector_store %arg5[%c0_28, %c0_29], %91 {strides = array<i32>} : memref<16x32xf32, #tpu.memory_space<vmem>>, vector<16x32xf32>,
    return
  }
  func.func @transform_0(%arg0: i32) -> (i32, i32) {
    %c0_i32 = arith.constant 0 : i32
    %c0_i32_0 = arith.constant 0 : i32
    %c0_i32_1 = arith.constant 0 : i32
    return %c0_i32, %c0_i32_0 : i32, i32
  }
  func.func @transform_1(%arg0: i32) -> (i32, i32) {
    %c0_i32 = arith.constant 0 : i32
    %c0_i32_0 = arith.constant 0 : i32
    %c0_i32_1 = arith.constant 0 : i32
    return %c0_i32, %c0_i32_0 : i32, i32
  }
  func.func @transform_2(%arg0: i32) -> (i32, i32) {
    %c0_i32 = arith.constant 0 : i32
    %c0_i32_0 = arith.constant 0 : i32
    %c0_i32_1 = arith.constant 0 : i32
    return %c0_i32, %c0_i32_0 : i32, i32
  }
  func.func @transform_3(%arg0: i32) -> (i32, i32) {
    %c0_i32 = arith.constant 0 : i32
    %c0_i32_0 = arith.constant 0 : i32
    %c0_i32_1 = arith.constant 0 : i32
    return %c0_i32, %c0_i32_0 : i32, i32
  }
  func.func @transform_4(%arg0: i32) -> (i32, i32) {
    %c0_i32 = arith.constant 0 : i32
    %c0_i32_0 = arith.constant 0 : i32
    %c0_i32_1 = arith.constant 0 : i32
    return %c0_i32, %c0_i32_0 : i32, i32
  }
}

</mosaic_0001>

<llo_original>
// kernel: tpu_custom_call.1
$region0: #{tpu_custom_call.1}
  #allocation0 [shape = 'u32[]', space=smem, size = 0x4, offset = 0x4, fixed_abs, tag = 'smem constant byte address 0x4 - core index']
  #allocation1 [shape = 'u32[144,128]{1,0:T(1,128)}', space=vmem, size = 0x12000, scoped, tag = 'internal scratch']
  %s0 = inlined_call_operand.hbm [shape: f32[16,32], index: 0, kind: input, shape index: {}]
  %s1 = inlined_call_operand.hbm [shape: f32[32,96], index: 1, kind: input, shape index: {}]
  %s2 = inlined_call_operand.hbm [shape: f32[32,32], index: 2, kind: input, shape index: {}]
  %s3 = inlined_call_operand.vmem [shape: f32[1,32], index: 3, kind: input, shape index: {}]
  %s4 = inlined_call_operand.hbm [shape: f32[16,32], index: 4, kind: output, shape index: {}]
  %s5 = sld [smem:[#allocation0]]
  $region38: #{tpu_custom_call.1} parent=0
    _
  %s7 = ssub.s32 1, %s5
  %s8 = scalar_select 0, %s7, %s5
  $region1: #{tpu_custom_call.1} parent=0
    #allocation2 [shape = 'u8[8192]{0}', space=vmem, size = 0x2000, scoped, tag = 'input window, operand 0, single buffered']
    #allocation3 [shape = 's32[1]{0}', space=sflag, size = 0x4, scoped, tag = 'scoped memory for tpu_custom_call.1']
    #allocation4 [shape = 's32[1]{0}', space=sflag, size = 0x4, scoped, tag = 'scoped memory for tpu_custom_call.1']
    #allocation5 [shape = 'u8[16384]{0}', space=vmem, size = 0x4000, scoped, tag = 'input window, operand 1, single buffered']
    #allocation6 [shape = 's32[1]{0}', space=sflag, size = 0x4, scoped, tag = 'scoped memory for tpu_custom_call.1']
    #allocation7 [shape = 'u8[16384]{0}', space=vmem, size = 0x4000, scoped, tag = 'input window, operand 2, single buffered']
    #allocation8 [shape = 'u8[8192]{0}', space=vmem, size = 0x2000, scoped, tag = 'output window, operand 0, single buffered']
    %9 = vsyncpa [#allocation3], 0
    %10 = vsyncpa [#allocation6], 0
    %11 = vsyncpa [#allocation4], 0
    // Predicated region
    $region2: #{tpu_custom_call.1} parent=1 // pred_check
      _
    $region3: #{tpu_custom_call.1} parent=1 // pred_check_branch
      %13 = sbr.rel (0) target = $region5
    $region4: #{tpu_custom_call.1} parent=1 // pred_region
      %s15 = ssub.s32 256, 256
      %16 = vsyncadd [#allocation3], %s15
      %s17 = sshll.u32 [#allocation2], 4
      %s18 = int_to_ptr.vmem [resolvable:$true] %s17
      %23 = dma.hbm_to_vmem [thread:$0]  %s0, 256, %s18, [#allocation3], 128, 128, 8
    $region5: #{tpu_custom_call.1} parent=1 // pred_fallthru
      _
    // Predicated region
    $region6: #{tpu_custom_call.1} parent=1 // pred_check
      _
    $region7: #{tpu_custom_call.1} parent=1 // pred_check_branch
      %25 = sbr.rel (0) target = $region9
    $region8: #{tpu_custom_call.1} parent=1 // pred_region
      %s27 = ssub.s32 512, 512
      %28 = vsyncadd [#allocation6], %s27
      %s29 = sshll.u32 [#allocation5], 4
      %s30 = int_to_ptr.vmem [resolvable:$true] %s29
      %35 = dma.hbm_to_vmem [thread:$0]  %s1, 512, %s30, [#allocation6], 128, 128, 8
    $region9: #{tpu_custom_call.1} parent=1 // pred_fallthru
      _
    // Predicated region
    $region10: #{tpu_custom_call.1} parent=1 // pred_check
      _
    $region11: #{tpu_custom_call.1} parent=1 // pred_check_branch
      %37 = sbr.rel (0) target = $region13
    $region12: #{tpu_custom_call.1} parent=1 // pred_region
      %s39 = ssub.s32 512, 512
      %40 = vsyncadd [#allocation6], %s39
      %s41 = sshll.u32 [#allocation7], 4
      %s42 = int_to_ptr.vmem [resolvable:$true] %s41
      %47 = dma.hbm_to_vmem [thread:$0]  %s2, 512, %s42, [#allocation6], 128, 128, 8
    $region13: #{tpu_custom_call.1} parent=1 // pred_fallthru
      _
    // Predicated region
    $region14: #{tpu_custom_call.1} parent=1 // pred_check
      _
    $region15: #{tpu_custom_call.1} parent=1 // pred_check_branch
      %49 = sbr.rel (0) target = $region17
    $region16: #{tpu_custom_call.1} parent=1 // pred_region
      _
    $region17: #{tpu_custom_call.1} parent=1 // pred_fallthru
      _
    // Predicated region
    $region18: #{tpu_custom_call.1} parent=1 // pred_check
      _
    $region19: #{tpu_custom_call.1} parent=1 // pred_check_branch
      %51 = sbr.rel (0) target = $region21
    $region20: #{tpu_custom_call.1} parent=1 // pred_region
      %52 = dma.done [#allocation3], 256
    $region21: #{tpu_custom_call.1} parent=1 // pred_fallthru
      _
    // Predicated region
    $region22: #{tpu_custom_call.1} parent=1 // pred_check
      _
    $region23: #{tpu_custom_call.1} parent=1 // pred_check_branch
      %54 = sbr.rel (0) target = $region25
    $region24: #{tpu_custom_call.1} parent=1 // pred_region
      %55 = dma.done [#allocation6], 512
    $region25: #{tpu_custom_call.1} parent=1 // pred_fallthru
      _
    // Predicated region
    $region26: #{tpu_custom_call.1} parent=1 // pred_check
      _
    $region27: #{tpu_custom_call.1} parent=1 // pred_check_branch
      %57 = sbr.rel (0) target = $region29
    $region28: #{tpu_custom_call.1} parent=1 // pred_region
      %58 = dma.done [#allocation6], 512
    $region29: #{tpu_custom_call.1} parent=1 // pred_fallthru
      _
    %v59 = vld [vmem:[#allocation2] sm:$0xff]
    %v60 = vld [vmem:[#allocation2 + $0x8] sm:$0xff]
    %v61 = vld [vmem:[#allocation5] sm:$0xff]
    %v62 = vld [vmem:[#allocation5 + $0x8] sm:$0xff]
    %v63 = vld [vmem:[#allocation5 + $0x10] sm:$0xff]
    %v64 = vld [vmem:[#allocation5 + $0x18] sm:$0xff]
    %vm65 = vcmask 261120
    %v67 = vsel %vm65, %v59, 0
    %v70 = vsel %vm65, %v60, 0
    %72 = vmatprep.subr.mxu0 0.0
    %73 = vmatpush1.msra.mxu0 %v61
    %74 = vmatprep.subr.mxu0 0.0
    %75 = vmatpush1.msra.mxu0 %v62
    %76 = vmatprep.subr.mxu0 0.0
    %77 = vmatpush1.msra.mxu0 %v63
    %78 = vmatprep.subr.mxu0 0.0
    %79 = vmatpush1.msra.mxu0 %v64
    %80 = vmatprep.subr.mxu0 0.0
    %81 = vmatpush1.msra.mxu0 0.0
    %82 = vmatprep.subr.mxu0 0.0
    %83 = vmatpush1.msra.mxu0 0.0
    %84 = vmatprep.subr.mxu0 0.0
    %85 = vmatpush1.msra.mxu0 0.0
    %86 = vmatprep.subr.mxu0 0.0
    %87 = vmatpush1.msra.mxu0 0.0
    %88 = vmatprep.subr.mxu0 0.0
    %89 = vmatpush1.msra.mxu0 0.0
    %90 = vmatprep.subr.mxu0 0.0
    %91 = vmatpush1.msra.mxu0 0.0
    %92 = vmatprep.subr.mxu0 0.0
    %93 = vmatpush1.msra.mxu0 0.0
    %94 = vmatprep.subr.mxu0 0.0
    %95 = vmatpush1.msra.mxu0 0.0
    %96 = vmatprep.subr.mxu0 0.0
    %97 = vmatpush1.msra.mxu0 0.0
    %98 = vmatprep.subr.mxu0 0.0
    %99 = vmatpush1.msra.mxu0 0.0
    %100 = vmatprep.subr.mxu0 0.0
    %101 = vmatpush1.msra.mxu0 0.0
    %102 = vmatprep.subr.mxu0 0.0
    %103 = vmatpush1.msra.mxu0 0.0
    %104 = vmatprep.subr.mxu0 0.0
    %105 = vmatpush1.msra.mxu0 0.0
    %106 = vmatprep.subr.mxu0 0.0
    %107 = vmatpush1.msra.mxu0 0.0
    %108 = vmatprep.subr.mxu0 0.0
    %109 = vmatpush1.msra.mxu0 0.0
    %110 = vmatprep.subr.mxu0 0.0
    %111 = vmatpush1.msra.mxu0 0.0
    %112 = vmatprep.subr.mxu0 0.0
    %113 = vmatpush1.msra.mxu0 0.0
    %114 = vmatprep.subr.mxu0 0.0
    %115 = vmatpush1.msra.mxu0 0.0
    %116 = vmatprep.subr.mxu0 0.0
    %117 = vmatpush1.msra.mxu0 0.0
    %118 = vmatprep.subr.mxu0 0.0
    %119 = vmatpush1.msra.mxu0 0.0
    %120 = vmatprep.subr.mxu0 0.0
    %121 = vmatpush1.msra.mxu0 0.0
    %122 = vmatprep.subr.mxu0 0.0
    %123 = vmatpush1.msra.mxu0 0.0
    %124 = vmatprep.subr.mxu0 0.0
    %125 = vmatpush1.msra.mxu0 0.0
    %126 = vmatprep.subr.mxu0 0.0
    %127 = vmatpush1.msra.mxu0 0.0
    %128 = vmatprep.subr.mxu0 0.0
    %129 = vmatpush1.msra.mxu0 0.0
    %130 = vmatprep.subr.mxu0 0.0
    %131 = vmatpush1.msra.mxu0 0.0
    %132 = vmatprep.subr.mxu0 0.0
    %133 = vmatpush1.msra.mxu0 0.0
    %134 = vmatprep.subr.mxu0 0.0
    %135 = vmatpush1.msra.mxu0 0.0
    %136 = vmatprep.mubr.f32.mxu0 0.0
    %137 = vmatmul.mubr.f32.gmra.mrb[0].mxu0 %v67
    %v138 = vpop.f32.mrb[0].mxu0
    %v139 = vadd.f32 0.0, %v138
    %v140 = vpop.f32.mrb[0].mxu0
    %141 = vmatprep.mubr.f32.mxu0 0.0
    %142 = vmatmul.mubr.f32.gmra.mrb[0].mxu0 %v70
    %v143 = vpop.f32.mrb[0].mxu0
    %v144 = vadd.f32 0.0, %v143
    %v145 = vpop.f32.mrb[0].mxu0
    %146 = vdwg.mxu0
    %v147 = vld [vmem:[#allocation7] sm:$0xff]
    %v148 = vld [vmem:[#allocation7 + $0x8] sm:$0xff]
    %v149 = vld [vmem:[#allocation7 + $0x10] sm:$0xff]
    %v150 = vld [vmem:[#allocation7 + $0x18] sm:$0xff]
    %152 = vrot.lane.b32.xlu0 %v139, 96
    %v153 = vpop.permute.xlu0 %152
    %vm154 = vcmask 64512
    %v155 = vsel %vm154, %v139, 0
    %v157 = vsel %vm154, %v153, 0
    %159 = vmatprep.subr.mxu0 0.0
    %160 = vmatpush1.xpose.msra.mxu0 %v157
    %161 = vmatprep.subr.mxu0 0.0
    %162 = vmatpush1.xpose.msra.mxu0 0.0
    %163 = vmatprep.subr.mxu0 0.0
    %164 = vmatpush1.xpose.msra.mxu0 0.0
    %165 = vmatprep.subr.mxu0 0.0
    %166 = vmatpush1.xpose.msra.mxu0 0.0
    %167 = vmatprep.subr.mxu0 0.0
    %168 = vmatpush1.xpose.msra.mxu0 0.0
    %169 = vmatprep.subr.mxu0 0.0
    %170 = vmatpush1.xpose.msra.mxu0 0.0
    %171 = vmatprep.subr.mxu0 0.0
    %172 = vmatpush1.xpose.msra.mxu0 0.0
    %173 = vmatprep.subr.mxu0 0.0
    %174 = vmatpush1.xpose.msra.mxu0 0.0
    %175 = vmatprep.subr.mxu0 0.0
    %176 = vmatpush1.xpose.msra.mxu0 0.0
    %177 = vmatprep.subr.mxu0 0.0
    %178 = vmatpush1.xpose.msra.mxu0 0.0
    %179 = vmatprep.subr.mxu0 0.0
    %180 = vmatpush1.xpose.msra.mxu0 0.0
    %181 = vmatprep.subr.mxu0 0.0
    %182 = vmatpush1.xpose.msra.mxu0 0.0
    %183 = vmatprep.subr.mxu0 0.0
    %184 = vmatpush1.xpose.msra.mxu0 0.0
    %185 = vmatprep.subr.mxu0 0.0
    %186 = vmatpush1.xpose.msra.mxu0 0.0
    %187 = vmatprep.subr.mxu0 0.0
    %188 = vmatpush1.xpose.msra.mxu0 0.0
    %189 = vmatprep.subr.mxu0 0.0
    %190 = vmatpush1.xpose.msra.mxu0 0.0
    %191 = vmatprep.subr.mxu0 0.0
    %192 = vmatpush1.xpose.msra.mxu0 0.0
    %193 = vmatprep.subr.mxu0 0.0
    %194 = vmatpush1.xpose.msra.mxu0 0.0
    %195 = vmatprep.subr.mxu0 0.0
    %196 = vmatpush1.xpose.msra.mxu0 0.0
    %197 = vmatprep.subr.mxu0 0.0
    %198 = vmatpush1.xpose.msra.mxu0 0.0
    %199 = vmatprep.subr.mxu0 0.0
    %200 = vmatpush1.xpose.msra.mxu0 0.0
    %201 = vmatprep.subr.mxu0 0.0
    %202 = vmatpush1.xpose.msra.mxu0 0.0
    %203 = vmatprep.subr.mxu0 0.0
    %204 = vmatpush1.xpose.msra.mxu0 0.0
    %205 = vmatprep.subr.mxu0 0.0
    %206 = vmatpush1.xpose.msra.mxu0 0.0
    %207 = vmatprep.subr.mxu0 0.0
    %208 = vmatpush1.xpose.msra.mxu0 0.0
    %209 = vmatprep.subr.mxu0 0.0
    %210 = vmatpush1.xpose.msra.mxu0 0.0
    %211 = vmatprep.subr.mxu0 0.0
    %212 = vmatpush1.xpose.msra.mxu0 0.0
    %213 = vmatprep.subr.mxu0 0.0
    %214 = vmatpush1.xpose.msra.mxu0 0.0
    %215 = vmatprep.subr.mxu0 0.0
    %216 = vmatpush1.xpose.msra.mxu0 0.0
    %217 = vmatprep.subr.mxu0 0.0
    %218 = vmatpush1.xpose.msra.mxu0 0.0
    %219 = vmatprep.subr.mxu0 0.0
    %220 = vmatpush1.xpose.msra.mxu0 0.0
    %221 = vmatprep.subr.mxu0 0.0
    %222 = vmatpush1.xpose.msra.mxu0 0.0
    %223 = vmatprep.mubr.f32.mxu0 0.0
    %224 = vmatmul.mubr.f32.gmra.mrb[0].mxu0 %v155
    %v225 = vpop.f32.mrb[0].mxu0
    %v226 = vadd.f32 0.0, %v225
    %v227 = vpop.f32.mrb[0].mxu0
    %228 = vdwg.mxu0
    %230 = vrot.lane.b32.xlu0 %v144, 96
    %v231 = vpop.permute.xlu0 %230
    %v232 = vsel %vm154, %v144, 0
    %v234 = vsel %vm154, %v231, 0
    %236 = vmatprep.subr.mxu0 0.0
    %237 = vmatpush1.xpose.msra.mxu0 %v234
    %238 = vmatprep.subr.mxu0 0.0
    %239 = vmatpush1.xpose.msra.mxu0 0.0
    %240 = vmatprep.subr.mxu0 0.0
    %241 = vmatpush1.xpose.msra.mxu0 0.0
    %242 = vmatprep.subr.mxu0 0.0
    %243 = vmatpush1.xpose.msra.mxu0 0.0
    %244 = vmatprep.subr.mxu0 0.0
    %245 = vmatpush1.xpose.msra.mxu0 0.0
    %246 = vmatprep.subr.mxu0 0.0
    %247 = vmatpush1.xpose.msra.mxu0 0.0
    %248 = vmatprep.subr.mxu0 0.0
    %249 = vmatpush1.xpose.msra.mxu0 0.0
    %250 = vmatprep.subr.mxu0 0.0
    %251 = vmatpush1.xpose.msra.mxu0 0.0
    %252 = vmatprep.subr.mxu0 0.0
    %253 = vmatpush1.xpose.msra.mxu0 0.0
    %254 = vmatprep.subr.mxu0 0.0
    %255 = vmatpush1.xpose.msra.mxu0 0.0
    %256 = vmatprep.subr.mxu0 0.0
    %257 = vmatpush1.xpose.msra.mxu0 0.0
    %258 = vmatprep.subr.mxu0 0.0
    %259 = vmatpush1.xpose.msra.mxu0 0.0
    %260 = vmatprep.subr.mxu0 0.0
    %261 = vmatpush1.xpose.msra.mxu0 0.0
    %262 = vmatprep.subr.mxu0 0.0
    %263 = vmatpush1.xpose.msra.mxu0 0.0
    %264 = vmatprep.subr.mxu0 0.0
    %265 = vmatpush1.xpose.msra.mxu0 0.0
    %266 = vmatprep.subr.mxu0 0.0
    %267 = vmatpush1.xpose.msra.mxu0 0.0
    %268 = vmatprep.subr.mxu0 0.0
    %269 = vmatpush1.xpose.msra.mxu0 0.0
    %270 = vmatprep.subr.mxu0 0.0
    %271 = vmatpush1.xpose.msra.mxu0 0.0
    %272 = vmatprep.subr.mxu0 0.0
    %273 = vmatpush1.xpose.msra.mxu0 0.0
    %274 = vmatprep.subr.mxu0 0.0
    %275 = vmatpush1.xpose.msra.mxu0 0.0
    %276 = vmatprep.subr.mxu0 0.0
    %277 = vmatpush1.xpose.msra.mxu0 0.0
    %278 = vmatprep.subr.mxu0 0.0
    %279 = vmatpush1.xpose.msra.mxu0 0.0
    %280 = vmatprep.subr.mxu0 0.0
    %281 = vmatpush1.xpose.msra.mxu0 0.0
    %282 = vmatprep.subr.mxu0 0.0
    %283 = vmatpush1.xpose.msra.mxu0 0.0
    %284 = vmatprep.subr.mxu0 0.0
    %285 = vmatpush1.xpose.msra.mxu0 0.0
    %286 = vmatprep.subr.mxu0 0.0
    %287 = vmatpush1.xpose.msra.mxu0 0.0
    %288 = vmatprep.subr.mxu0 0.0
    %289 = vmatpush1.xpose.msra.mxu0 0.0
    %290 = vmatprep.subr.mxu0 0.0
    %291 = vmatpush1.xpose.msra.mxu0 0.0
    %292 = vmatprep.subr.mxu0 0.0
    %293 = vmatpush1.xpose.msra.mxu0 0.0
    %294 = vmatprep.subr.mxu0 0.0
    %295 = vmatpush1.xpose.msra.mxu0 0.0
    %296 = vmatprep.subr.mxu0 0.0
    %297 = vmatpush1.xpose.msra.mxu0 0.0
    %298 = vmatprep.subr.mxu0 0.0
    %299 = vmatpush1.xpose.msra.mxu0 0.0
    %300 = vmatprep.mubr.f32.mxu0 0.0
    %301 = vmatmul.mubr.f32.gmra.mrb[0].mxu0 %v232
    %v302 = vpop.f32.mrb[0].mxu0
    %v303 = vadd.f32 0.0, %v302
    %v304 = vpop.f32.mrb[0].mxu0
    %305 = vdwg.mxu0
    %v306 = vsel %vm154, %v226, -inf
    %307 = vmax.xlane.f32.xlu0 %v306
    %v308 = vpop.xlane.xlu0 %307
    %v309 = vsel %vm154, %v303, -inf
    %310 = vmax.xlane.f32.xlu0 %v309
    %v311 = vpop.xlane.xlu0 %310
    %v312 = vsub.f32 %v226, %v308
    %v313 = vsub.f32 %v303, %v311
    %v314 = vmul.f32 %v312, 1.442695
    %v315 = vpow.pop %v314
    %v316 = vmul.f32 %v313, 1.442695
    %v317 = vpow.pop %v316
    %v318 = vsel %vm154, %v315, 0.0
    %319 = vadd.xlane.f32.xlu0 %v318
    %v320 = vpop.xlane.xlu0 %319
    %v321 = vsel %vm154, %v317, 0.0
    %322 = vadd.xlane.f32.xlu0 %v321
    %v323 = vpop.xlane.xlu0 %322
    %v324 = vrcp.pop %v320
    %v325 = vmul.f32 %v315, %v324
    %v326 = vrcp.pop %v323
    %v327 = vmul.f32 %v317, %v326
    %328 = vrot.lane.b32.xlu0 %v139, 64
    %v329 = vpop.permute.xlu0 %328
    %v332 = vsel %vm154, %v325, 0
    %334 = vmatprep.subr.mxu0 0.0
    %335 = vmatpush1.msra.mxu0 %v329
    %336 = vmatprep.subr.mxu0 0.0
    %337 = vmatpush1.msra.mxu0 0.0
    %338 = vmatprep.subr.mxu0 0.0
    %339 = vmatpush1.msra.mxu0 0.0
    %340 = vmatprep.subr.mxu0 0.0
    %341 = vmatpush1.msra.mxu0 0.0
    %342 = vmatprep.subr.mxu0 0.0
    %343 = vmatpush1.msra.mxu0 0.0
    %344 = vmatprep.subr.mxu0 0.0
    %345 = vmatpush1.msra.mxu0 0.0
    %346 = vmatprep.subr.mxu0 0.0
    %347 = vmatpush1.msra.mxu0 0.0
    %348 = vmatprep.subr.mxu0 0.0
    %349 = vmatpush1.msra.mxu0 0.0
    %350 = vmatprep.subr.mxu0 0.0
    %351 = vmatpush1.msra.mxu0 0.0
    %352 = vmatprep.subr.mxu0 0.0
    %353 = vmatpush1.msra.mxu0 0.0
    %354 = vmatprep.subr.mxu0 0.0
    %355 = vmatpush1.msra.mxu0 0.0
    %356 = vmatprep.subr.mxu0 0.0
    %357 = vmatpush1.msra.mxu0 0.0
    %358 = vmatprep.subr.mxu0 0.0
    %359 = vmatpush1.msra.mxu0 0.0
    %360 = vmatprep.subr.mxu0 0.0
    %361 = vmatpush1.msra.mxu0 0.0
    %362 = vmatprep.subr.mxu0 0.0
    %363 = vmatpush1.msra.mxu0 0.0
    %364 = vmatprep.subr.mxu0 0.0
    %365 = vmatpush1.msra.mxu0 0.0
    %366 = vmatprep.subr.mxu0 0.0
    %367 = vmatpush1.msra.mxu0 0.0
    %368 = vmatprep.subr.mxu0 0.0
    %369 = vmatpush1.msra.mxu0 0.0
    %370 = vmatprep.subr.mxu0 0.0
    %371 = vmatpush1.msra.mxu0 0.0
    %372 = vmatprep.subr.mxu0 0.0
    %373 = vmatpush1.msra.mxu0 0.0
    %374 = vmatprep.subr.mxu0 0.0
    %375 = vmatpush1.msra.mxu0 0.0
    %376 = vmatprep.subr.mxu0 0.0
    %377 = vmatpush1.msra.mxu0 0.0
    %378 = vmatprep.subr.mxu0 0.0
    %379 = vmatpush1.msra.mxu0 0.0
    %380 = vmatprep.subr.mxu0 0.0
    %381 = vmatpush1.msra.mxu0 0.0
    %382 = vmatprep.subr.mxu0 0.0
    %383 = vmatpush1.msra.mxu0 0.0
    %384 = vmatprep.subr.mxu0 0.0
    %385 = vmatpush1.msra.mxu0 0.0
    %386 = vmatprep.subr.mxu0 0.0
    %387 = vmatpush1.msra.mxu0 0.0
    %388 = vmatprep.subr.mxu0 0.0
    %389 = vmatpush1.msra.mxu0 0.0
    %390 = vmatprep.subr.mxu0 0.0
    %391 = vmatpush1.msra.mxu0 0.0
    %392 = vmatprep.subr.mxu0 0.0
    %393 = vmatpush1.msra.mxu0 0.0
    %394 = vmatprep.subr.mxu0 0.0
    %395 = vmatpush1.msra.mxu0 0.0
    %396 = vmatprep.subr.mxu0 0.0
    %397 = vmatpush1.msra.mxu0 0.0
    %398 = vmatprep.mubr.f32.mxu0 0.0
    %399 = vmatmul.mubr.f32.gmra.mrb[0].mxu0 %v332
    %v400 = vpop.f32.mrb[0].mxu0
    %v401 = vadd.f32 0.0, %v400
    %v402 = vpop.f32.mrb[0].mxu0
    %403 = vdwg.mxu0
    %404 = vrot.lane.b32.xlu0 %v144, 64
    %v405 = vpop.permute.xlu0 %404
    %v408 = vsel %vm154, %v327, 0
    %410 = vmatprep.subr.mxu0 0.0
    %411 = vmatpush1.msra.mxu0 %v405
    %412 = vmatprep.subr.mxu0 0.0
    %413 = vmatpush1.msra.mxu0 0.0
    %414 = vmatprep.subr.mxu0 0.0
    %415 = vmatpush1.msra.mxu0 0.0
    %416 = vmatprep.subr.mxu0 0.0
    %417 = vmatpush1.msra.mxu0 0.0
    %418 = vmatprep.subr.mxu0 0.0
    %419 = vmatpush1.msra.mxu0 0.0
    %420 = vmatprep.subr.mxu0 0.0
    %421 = vmatpush1.msra.mxu0 0.0
    %422 = vmatprep.subr.mxu0 0.0
    %423 = vmatpush1.msra.mxu0 0.0
    %424 = vmatprep.subr.mxu0 0.0
    %425 = vmatpush1.msra.mxu0 0.0
    %426 = vmatprep.subr.mxu0 0.0
    %427 = vmatpush1.msra.mxu0 0.0
    %428 = vmatprep.subr.mxu0 0.0
    %429 = vmatpush1.msra.mxu0 0.0
    %430 = vmatprep.subr.mxu0 0.0
    %431 = vmatpush1.msra.mxu0 0.0
    %432 = vmatprep.subr.mxu0 0.0
    %433 = vmatpush1.msra.mxu0 0.0
    %434 = vmatprep.subr.mxu0 0.0
    %435 = vmatpush1.msra.mxu0 0.0
    %436 = vmatprep.subr.mxu0 0.0
    %437 = vmatpush1.msra.mxu0 0.0
    %438 = vmatprep.subr.mxu0 0.0
    %439 = vmatpush1.msra.mxu0 0.0
    %440 = vmatprep.subr.mxu0 0.0
    %441 = vmatpush1.msra.mxu0 0.0
    %442 = vmatprep.subr.mxu0 0.0
    %443 = vmatpush1.msra.mxu0 0.0
    %444 = vmatprep.subr.mxu0 0.0
    %445 = vmatpush1.msra.mxu0 0.0
    %446 = vmatprep.subr.mxu0 0.0
    %447 = vmatpush1.msra.mxu0 0.0
    %448 = vmatprep.subr.mxu0 0.0
    %449 = vmatpush1.msra.mxu0 0.0
    %450 = vmatprep.subr.mxu0 0.0
    %451 = vmatpush1.msra.mxu0 0.0
    %452 = vmatprep.subr.mxu0 0.0
    %453 = vmatpush1.msra.mxu0 0.0
    %454 = vmatprep.subr.mxu0 0.0
    %455 = vmatpush1.msra.mxu0 0.0
    %456 = vmatprep.subr.mxu0 0.0
    %457 = vmatpush1.msra.mxu0 0.0
    %458 = vmatprep.subr.mxu0 0.0
    %459 = vmatpush1.msra.mxu0 0.0
    %460 = vmatprep.subr.mxu0 0.0
    %461 = vmatpush1.msra.mxu0 0.0
    %462 = vmatprep.subr.mxu0 0.0
    %463 = vmatpush1.msra.mxu0 0.0
    %464 = vmatprep.subr.mxu0 0.0
    %465 = vmatpush1.msra.mxu0 0.0
    %466 = vmatprep.subr.mxu0 0.0
    %467 = vmatpush1.msra.mxu0 0.0
    %468 = vmatprep.subr.mxu0 0.0
    %469 = vmatpush1.msra.mxu0 0.0
    %470 = vmatprep.subr.mxu0 0.0
    %471 = vmatpush1.msra.mxu0 0.0
    %472 = vmatprep.subr.mxu0 0.0
    %473 = vmatpush1.msra.mxu0 0.0
    %474 = vmatprep.mubr.f32.mxu0 0.0
    %475 = vmatmul.mubr.f32.gmra.mrb[0].mxu0 %v408
    %v476 = vpop.f32.mrb[0].mxu0
    %v477 = vadd.f32 0.0, %v476
    %v478 = vpop.f32.mrb[0].mxu0
    %479 = vdwg.mxu0
    %480 = vrot.lane.b32.xlu0 %v139, 120
    %v481 = vpop.permute.xlu0 %480
    %482 = vrot.lane.b32.xlu0 %v139, 88
    %v483 = vpop.permute.xlu0 %482
    %v484 = vsel %vm154, %v481, 0
    %v486 = vsel %vm154, %v483, 0
    %488 = vmatprep.subr.mxu0 0.0
    %489 = vmatpush1.xpose.msra.mxu0 %v486
    %490 = vmatprep.subr.mxu0 0.0
    %491 = vmatpush1.xpose.msra.mxu0 0.0
    %492 = vmatprep.subr.mxu0 0.0
    %493 = vmatpush1.xpose.msra.mxu0 0.0
    %494 = vmatprep.subr.mxu0 0.0
    %495 = vmatpush1.xpose.msra.mxu0 0.0
    %496 = vmatprep.subr.mxu0 0.0
    %497 = vmatpush1.xpose.msra.mxu0 0.0
    %498 = vmatprep.subr.mxu0 0.0
    %499 = vmatpush1.xpose.msra.mxu0 0.0
    %500 = vmatprep.subr.mxu0 0.0
    %501 = vmatpush1.xpose.msra.mxu0 0.0
    %502 = vmatprep.subr.mxu0 0.0
    %503 = vmatpush1.xpose.msra.mxu0 0.0
    %504 = vmatprep.subr.mxu0 0.0
    %505 = vmatpush1.xpose.msra.mxu0 0.0
    %506 = vmatprep.subr.mxu0 0.0
    %507 = vmatpush1.xpose.msra.mxu0 0.0
    %508 = vmatprep.subr.mxu0 0.0
    %509 = vmatpush1.xpose.msra.mxu0 0.0
    %510 = vmatprep.subr.mxu0 0.0
    %511 = vmatpush1.xpose.msra.mxu0 0.0
    %512 = vmatprep.subr.mxu0 0.0
    %513 = vmatpush1.xpose.msra.mxu0 0.0
    %514 = vmatprep.subr.mxu0 0.0
    %515 = vmatpush1.xpose.msra.mxu0 0.0
    %516 = vmatprep.subr.mxu0 0.0
    %517 = vmatpush1.xpose.msra.mxu0 0.0
    %518 = vmatprep.subr.mxu0 0.0
    %519 = vmatpush1.xpose.msra.mxu0 0.0
    %520 = vmatprep.subr.mxu0 0.0
    %521 = vmatpush1.xpose.msra.mxu0 0.0
    %522 = vmatprep.subr.mxu0 0.0
    %523 = vmatpush1.xpose.msra.mxu0 0.0
    %524 = vmatprep.subr.mxu0 0.0
    %525 = vmatpush1.xpose.msra.mxu0 0.0
    %526 = vmatprep.subr.mxu0 0.0
    %527 = vmatpush1.xpose.msra.mxu0 0.0
    %528 = vmatprep.subr.mxu0 0.0
    %529 = vmatpush1.xpose.msra.mxu0 0.0
    %530 = vmatprep.subr.mxu0 0.0
    %531 = vmatpush1.xpose.msra.mxu0 0.0
    %532 = vmatprep.subr.mxu0 0.0
    %533 = vmatpush1.xpose.msra.mxu0 0.0
    %534 = vmatprep.subr.mxu0 0.0
    %535 = vmatpush1.xpose.msra.mxu0 0.0
    %536 = vmatprep.subr.mxu0 0.0
    %537 = vmatpush1.xpose.msra.mxu0 0.0
    %538 = vmatprep.subr.mxu0 0.0
    %539 = vmatpush1.xpose.msra.mxu0 0.0
    %540 = vmatprep.subr.mxu0 0.0
    %541 = vmatpush1.xpose.msra.mxu0 0.0
    %542 = vmatprep.subr.mxu0 0.0
    %543 = vmatpush1.xpose.msra.mxu0 0.0
    %544 = vmatprep.subr.mxu0 0.0
    %545 = vmatpush1.xpose.msra.mxu0 0.0
    %546 = vmatprep.subr.mxu0 0.0
    %547 = vmatpush1.xpose.msra.mxu0 0.0
    %548 = vmatprep.subr.mxu0 0.0
    %549 = vmatpush1.xpose.msra.mxu0 0.0
    %550 = vmatprep.subr.mxu0 0.0
    %551 = vmatpush1.xpose.msra.mxu0 0.0
    %552 = vmatprep.mubr.f32.mxu0 0.0
    %553 = vmatmul.mubr.f32.gmra.mrb[0].mxu0 %v484
    %v554 = vpop.f32.mrb[0].mxu0
    %v555 = vadd.f32 0.0, %v554
    %v556 = vpop.f32.mrb[0].mxu0
    %557 = vdwg.mxu0
    %558 = vrot.lane.b32.xlu0 %v144, 120
    %v559 = vpop.permute.xlu0 %558
    %560 = vrot.lane.b32.xlu0 %v144, 88
    %v561 = vpop.permute.xlu0 %560
    %v562 = vsel %vm154, %v559, 0
    %v564 = vsel %vm154, %v561, 0
    %566 = vmatprep.subr.mxu0 0.0
    %567 = vmatpush1.xpose.msra.mxu0 %v564
    %568 = vmatprep.subr.mxu0 0.0
    %569 = vmatpush1.xpose.msra.mxu0 0.0
    %570 = vmatprep.subr.mxu0 0.0
    %571 = vmatpush1.xpose.msra.mxu0 0.0
    %572 = vmatprep.subr.mxu0 0.0
    %573 = vmatpush1.xpose.msra.mxu0 0.0
    %574 = vmatprep.subr.mxu0 0.0
    %575 = vmatpush1.xpose.msra.mxu0 0.0
    %576 = vmatprep.subr.mxu0 0.0
    %577 = vmatpush1.xpose.msra.mxu0 0.0
    %578 = vmatprep.subr.mxu0 0.0
    %579 = vmatpush1.xpose.msra.mxu0 0.0
    %580 = vmatprep.subr.mxu0 0.0
    %581 = vmatpush1.xpose.msra.mxu0 0.0
    %582 = vmatprep.subr.mxu0 0.0
    %583 = vmatpush1.xpose.msra.mxu0 0.0
    %584 = vmatprep.subr.mxu0 0.0
    %585 = vmatpush1.xpose.msra.mxu0 0.0
    %586 = vmatprep.subr.mxu0 0.0
    %587 = vmatpush1.xpose.msra.mxu0 0.0
    %588 = vmatprep.subr.mxu0 0.0
    %589 = vmatpush1.xpose.msra.mxu0 0.0
    %590 = vmatprep.subr.mxu0 0.0
    %591 = vmatpush1.xpose.msra.mxu0 0.0
    %592 = vmatprep.subr.mxu0 0.0
    %593 = vmatpush1.xpose.msra.mxu0 0.0
    %594 = vmatprep.subr.mxu0 0.0
    %595 = vmatpush1.xpose.msra.mxu0 0.0
    %596 = vmatprep.subr.mxu0 0.0
    %597 = vmatpush1.xpose.msra.mxu0 0.0
    %598 = vmatprep.subr.mxu0 0.0
    %599 = vmatpush1.xpose.msra.mxu0 0.0
    %600 = vmatprep.subr.mxu0 0.0
    %601 = vmatpush1.xpose.msra.mxu0 0.0
    %602 = vmatprep.subr.mxu0 0.0
    %603 = vmatpush1.xpose.msra.mxu0 0.0
    %604 = vmatprep.subr.mxu0 0.0
    %605 = vmatpush1.xpose.msra.mxu0 0.0
    %606 = vmatprep.subr.mxu0 0.0
    %607 = vmatpush1.xpose.msra.mxu0 0.0
    %608 = vmatprep.subr.mxu0 0.0
    %609 = vmatpush1.xpose.msra.mxu0 0.0
    %610 = vmatprep.subr.mxu0 0.0
    %611 = vmatpush1.xpose.msra.mxu0 0.0
    %612 = vmatprep.subr.mxu0 0.0
    %613 = vmatpush1.xpose.msra.mxu0 0.0
    %614 = vmatprep.subr.mxu0 0.0
    %615 = vmatpush1.xpose.msra.mxu0 0.0
    %616 = vmatprep.subr.mxu0 0.0
    %617 = vmatpush1.xpose.msra.mxu0 0.0
    %618 = vmatprep.subr.mxu0 0.0
    %619 = vmatpush1.xpose.msra.mxu0 0.0
    %620 = vmatprep.subr.mxu0 0.0
    %621 = vmatpush1.xpose.msra.mxu0 0.0
    %622 = vmatprep.subr.mxu0 0.0
    %623 = vmatpush1.xpose.msra.mxu0 0.0
    %624 = vmatprep.subr.mxu0 0.0
    %625 = vmatpush1.xpose.msra.mxu0 0.0
    %626 = vmatprep.subr.mxu0 0.0
    %627 = vmatpush1.xpose.msra.mxu0 0.0
    %628 = vmatprep.subr.mxu0 0.0
    %629 = vmatpush1.xpose.msra.mxu0 0.0
    %630 = vmatprep.mubr.f32.mxu0 0.0
    %631 = vmatmul.mubr.f32.gmra.mrb[0].mxu0 %v562
    %v632 = vpop.f32.mrb[0].mxu0
    %v633 = vadd.f32 0.0, %v632
    %v634 = vpop.f32.mrb[0].mxu0
    %635 = vdwg.mxu0
    %v636 = vsel %vm154, %v555, -inf
    %637 = vmax.xlane.f32.xlu0 %v636
    %v638 = vpop.xlane.xlu0 %637
    %v639 = vsel %vm154, %v633, -inf
    %640 = vmax.xlane.f32.xlu0 %v639
    %v641 = vpop.xlane.xlu0 %640
    %v642 = vsub.f32 %v555, %v638
    %v643 = vsub.f32 %v633, %v641
    %v644 = vmul.f32 %v642, 1.442695
    %v645 = vpow.pop %v644
    %v646 = vmul.f32 %v643, 1.442695
    %v647 = vpow.pop %v646
    %v648 = vsel %vm154, %v645, 0.0
    %649 = vadd.xlane.f32.xlu0 %v648
    %v650 = vpop.xlane.xlu0 %649
    %v651 = vsel %vm154, %v647, 0.0
    %652 = vadd.xlane.f32.xlu0 %v651
    %v653 = vpop.xlane.xlu0 %652
    %v654 = vrcp.pop %v650
    %v655 = vmul.f32 %v645, %v654
    %v656 = vrcp.pop %v653
    %v657 = vmul.f32 %v647, %v656
    %658 = vrot.lane.b32.xlu0 %v139, 56
    %v659 = vpop.permute.xlu0 %658
    %v662 = vsel %vm154, %v655, 0
    %664 = vmatprep.subr.mxu0 0.0
    %665 = vmatpush1.msra.mxu0 %v659
    %666 = vmatprep.subr.mxu0 0.0
    %667 = vmatpush1.msra.mxu0 0.0
    %668 = vmatprep.subr.mxu0 0.0
    %669 = vmatpush1.msra.mxu0 0.0
    %670 = vmatprep.subr.mxu0 0.0
    %671 = vmatpush1.msra.mxu0 0.0
    %672 = vmatprep.subr.mxu0 0.0
    %673 = vmatpush1.msra.mxu0 0.0
    %674 = vmatprep.subr.mxu0 0.0
    %675 = vmatpush1.msra.mxu0 0.0
    %676 = vmatprep.subr.mxu0 0.0
    %677 = vmatpush1.msra.mxu0 0.0
    %678 = vmatprep.subr.mxu0 0.0
    %679 = vmatpush1.msra.mxu0 0.0
    %680 = vmatprep.subr.mxu0 0.0
    %681 = vmatpush1.msra.mxu0 0.0
    %682 = vmatprep.subr.mxu0 0.0
    %683 = vmatpush1.msra.mxu0 0.0
    %684 = vmatprep.subr.mxu0 0.0
    %685 = vmatpush1.msra.mxu0 0.0
    %686 = vmatprep.subr.mxu0 0.0
    %687 = vmatpush1.msra.mxu0 0.0
    %688 = vmatprep.subr.mxu0 0.0
    %689 = vmatpush1.msra.mxu0 0.0
    %690 = vmatprep.subr.mxu0 0.0
    %691 = vmatpush1.msra.mxu0 0.0
    %692 = vmatprep.subr.mxu0 0.0
    %693 = vmatpush1.msra.mxu0 0.0
    %694 = vmatprep.subr.mxu0 0.0
    %695 = vmatpush1.msra.mxu0 0.0
    %696 = vmatprep.subr.mxu0 0.0
    %697 = vmatpush1.msra.mxu0 0.0
    %698 = vmatprep.subr.mxu0 0.0
    %699 = vmatpush1.msra.mxu0 0.0
    %700 = vmatprep.subr.mxu0 0.0
    %701 = vmatpush1.msra.mxu0 0.0
    %702 = vmatprep.subr.mxu0 0.0
    %703 = vmatpush1.msra.mxu0 0.0
    %704 = vmatprep.subr.mxu0 0.0
    %705 = vmatpush1.msra.mxu0 0.0
    %706 = vmatprep.subr.mxu0 0.0
    %707 = vmatpush1.msra.mxu0 0.0
    %708 = vmatprep.subr.mxu0 0.0
    %709 = vmatpush1.msra.mxu0 0.0
    %710 = vmatprep.subr.mxu0 0.0
    %711 = vmatpush1.msra.mxu0 0.0
    %712 = vmatprep.subr.mxu0 0.0
    %713 = vmatpush1.msra.mxu0 0.0
    %714 = vmatprep.subr.mxu0 0.0
    %715 = vmatpush1.msra.mxu0 0.0
    %716 = vmatprep.subr.mxu0 0.0
    %717 = vmatpush1.msra.mxu0 0.0
    %718 = vmatprep.subr.mxu0 0.0
    %719 = vmatpush1.msra.mxu0 0.0
    %720 = vmatprep.subr.mxu0 0.0
    %721 = vmatpush1.msra.mxu0 0.0
    %722 = vmatprep.subr.mxu0 0.0
    %723 = vmatpush1.msra.mxu0 0.0
    %724 = vmatprep.subr.mxu0 0.0
    %725 = vmatpush1.msra.mxu0 0.0
    %726 = vmatprep.subr.mxu0 0.0
    %727 = vmatpush1.msra.mxu0 0.0
    %728 = vmatprep.mubr.f32.mxu0 0.0
    %729 = vmatmul.mubr.f32.gmra.mrb[0].mxu0 %v662
    %v730 = vpop.f32.mrb[0].mxu0
    %v731 = vadd.f32 0.0, %v730
    %v732 = vpop.f32.mrb[0].mxu0
    %733 = vdwg.mxu0
    %734 = vrot.lane.b32.xlu0 %v144, 56
    %v735 = vpop.permute.xlu0 %734
    %v738 = vsel %vm154, %v657, 0
    %740 = vmatprep.subr.mxu0 0.0
    %741 = vmatpush1.msra.mxu0 %v735
    %742 = vmatprep.subr.mxu0 0.0
    %743 = vmatpush1.msra.mxu0 0.0
    %744 = vmatprep.subr.mxu0 0.0
    %745 = vmatpush1.msra.mxu0 0.0
    %746 = vmatprep.subr.mxu0 0.0
    %747 = vmatpush1.msra.mxu0 0.0
    %748 = vmatprep.subr.mxu0 0.0
    %749 = vmatpush1.msra.mxu0 0.0
    %750 = vmatprep.subr.mxu0 0.0
    %751 = vmatpush1.msra.mxu0 0.0
    %752 = vmatprep.subr.mxu0 0.0
    %753 = vmatpush1.msra.mxu0 0.0
    %754 = vmatprep.subr.mxu0 0.0
    %755 = vmatpush1.msra.mxu0 0.0
    %756 = vmatprep.subr.mxu0 0.0
    %757 = vmatpush1.msra.mxu0 0.0
    %758 = vmatprep.subr.mxu0 0.0
    %759 = vmatpush1.msra.mxu0 0.0
    %760 = vmatprep.subr.mxu0 0.0
    %761 = vmatpush1.msra.mxu0 0.0
    %762 = vmatprep.subr.mxu0 0.0
    %763 = vmatpush1.msra.mxu0 0.0
    %764 = vmatprep.subr.mxu0 0.0
    %765 = vmatpush1.msra.mxu0 0.0
    %766 = vmatprep.subr.mxu0 0.0
    %767 = vmatpush1.msra.mxu0 0.0
    %768 = vmatprep.subr.mxu0 0.0
    %769 = vmatpush1.msra.mxu0 0.0
    %770 = vmatprep.subr.mxu0 0.0
    %771 = vmatpush1.msra.mxu0 0.0
    %772 = vmatprep.subr.mxu0 0.0
    %773 = vmatpush1.msra.mxu0 0.0
    %774 = vmatprep.subr.mxu0 0.0
    %775 = vmatpush1.msra.mxu0 0.0
    %776 = vmatprep.subr.mxu0 0.0
    %777 = vmatpush1.msra.mxu0 0.0
    %778 = vmatprep.subr.mxu0 0.0
    %779 = vmatpush1.msra.mxu0 0.0
    %780 = vmatprep.subr.mxu0 0.0
    %781 = vmatpush1.msra.mxu0 0.0
    %782 = vmatprep.subr.mxu0 0.0
    %783 = vmatpush1.msra.mxu0 0.0
    %784 = vmatprep.subr.mxu0 0.0
    %785 = vmatpush1.msra.mxu0 0.0
    %786 = vmatprep.subr.mxu0 0.0
    %787 = vmatpush1.msra.mxu0 0.0
    %788 = vmatprep.subr.mxu0 0.0
    %789 = vmatpush1.msra.mxu0 0.0
    %790 = vmatprep.subr.mxu0 0.0
    %791 = vmatpush1.msra.mxu0 0.0
    %792 = vmatprep.subr.mxu0 0.0
    %793 = vmatpush1.msra.mxu0 0.0
    %794 = vmatprep.subr.mxu0 0.0
    %795 = vmatpush1.msra.mxu0 0.0
    %796 = vmatprep.subr.mxu0 0.0
    %797 = vmatpush1.msra.mxu0 0.0
    %798 = vmatprep.subr.mxu0 0.0
    %799 = vmatpush1.msra.mxu0 0.0
    %800 = vmatprep.subr.mxu0 0.0
    %801 = vmatpush1.msra.mxu0 0.0
    %802 = vmatprep.subr.mxu0 0.0
    %803 = vmatpush1.msra.mxu0 0.0
    %804 = vmatprep.mubr.f32.mxu0 0.0
    %805 = vmatmul.mubr.f32.gmra.mrb[0].mxu0 %v738
    %v806 = vpop.f32.mrb[0].mxu0
    %v807 = vadd.f32 0.0, %v806
    %v808 = vpop.f32.mrb[0].mxu0
    %809 = vdwg.mxu0
    %v811 = vsel %vm154, %v731, 0
    %v814 = vsel %vm154, %v807, 0
    %816 = vmatprep.subr.mxu0 0.0
    %817 = vmatpush1.msra.mxu0 %v148
    %818 = vmatprep.subr.mxu0 0.0
    %819 = vmatpush1.msra.mxu0 0.0
    %820 = vmatprep.subr.mxu0 0.0
    %821 = vmatpush1.msra.mxu0 0.0
    %822 = vmatprep.subr.mxu0 0.0
    %823 = vmatpush1.msra.mxu0 0.0
    %824 = vmatprep.subr.mxu0 0.0
    %825 = vmatpush1.msra.mxu0 0.0
    %826 = vmatprep.subr.mxu0 0.0
    %827 = vmatpush1.msra.mxu0 0.0
    %828 = vmatprep.subr.mxu0 0.0
    %829 = vmatpush1.msra.mxu0 0.0
    %830 = vmatprep.subr.mxu0 0.0
    %831 = vmatpush1.msra.mxu0 0.0
    %832 = vmatprep.subr.mxu0 0.0
    %833 = vmatpush1.msra.mxu0 0.0
    %834 = vmatprep.subr.mxu0 0.0
    %835 = vmatpush1.msra.mxu0 0.0
    %836 = vmatprep.subr.mxu0 0.0
    %837 = vmatpush1.msra.mxu0 0.0
    %838 = vmatprep.subr.mxu0 0.0
    %839 = vmatpush1.msra.mxu0 0.0
    %840 = vmatprep.subr.mxu0 0.0
    %841 = vmatpush1.msra.mxu0 0.0
    %842 = vmatprep.subr.mxu0 0.0
    %843 = vmatpush1.msra.mxu0 0.0
    %844 = vmatprep.subr.mxu0 0.0
    %845 = vmatpush1.msra.mxu0 0.0
    %846 = vmatprep.subr.mxu0 0.0
    %847 = vmatpush1.msra.mxu0 0.0
    %848 = vmatprep.subr.mxu0 0.0
    %849 = vmatpush1.msra.mxu0 0.0
    %850 = vmatprep.subr.mxu0 0.0
    %851 = vmatpush1.msra.mxu0 0.0
    %852 = vmatprep.subr.mxu0 0.0
    %853 = vmatpush1.msra.mxu0 0.0
    %854 = vmatprep.subr.mxu0 0.0
    %855 = vmatpush1.msra.mxu0 0.0
    %856 = vmatprep.subr.mxu0 0.0
    %857 = vmatpush1.msra.mxu0 0.0
    %858 = vmatprep.subr.mxu0 0.0
    %859 = vmatpush1.msra.mxu0 0.0
    %860 = vmatprep.subr.mxu0 0.0
    %861 = vmatpush1.msra.mxu0 0.0
    %862 = vmatprep.subr.mxu0 0.0
    %863 = vmatpush1.msra.mxu0 0.0
    %864 = vmatprep.subr.mxu0 0.0
    %865 = vmatpush1.msra.mxu0 0.0
    %866 = vmatprep.subr.mxu0 0.0
    %867 = vmatpush1.msra.mxu0 0.0
    %868 = vmatprep.subr.mxu0 0.0
    %869 = vmatpush1.msra.mxu0 0.0
    %870 = vmatprep.subr.mxu0 0.0
    %871 = vmatpush1.msra.mxu0 0.0
    %872 = vmatprep.subr.mxu0 0.0
    %873 = vmatpush1.msra.mxu0 0.0
    %874 = vmatprep.subr.mxu0 0.0
    %875 = vmatpush1.msra.mxu0 0.0
    %876 = vmatprep.subr.mxu0 0.0
    %877 = vmatpush1.msra.mxu0 0.0
    %878 = vmatprep.subr.mxu0 0.0
    %879 = vmatpush1.msra.mxu0 0.0
    %880 = vmatprep.mubr.f32.mxu0 0.0
    %881 = vmatmul.mubr.f32.gmra.mrb[0].mxu0 %v811
    %v882 = vpop.f32.mrb[0].mxu0
    %v883 = vadd.f32 0.0, %v882
    %v884 = vpop.f32.mrb[0].mxu0
    %885 = vmatprep.mubr.f32.mxu0 0.0
    %886 = vmatmul.mubr.f32.gmra.mrb[0].mxu0 %v814
    %v887 = vpop.f32.mrb[0].mxu0
    %v888 = vadd.f32 0.0, %v887
    %v889 = vpop.f32.mrb[0].mxu0
    %890 = vdwg.mxu0
    %v892 = vsel %vm154, %v401, 0
    %v895 = vsel %vm154, %v477, 0
    %897 = vmatprep.subr.mxu0 0.0
    %898 = vmatpush1.msra.mxu0 %v147
    %899 = vmatprep.subr.mxu0 0.0
    %900 = vmatpush1.msra.mxu0 0.0
    %901 = vmatprep.subr.mxu0 0.0
    %902 = vmatpush1.msra.mxu0 0.0
    %903 = vmatprep.subr.mxu0 0.0
    %904 = vmatpush1.msra.mxu0 0.0
    %905 = vmatprep.subr.mxu0 0.0
    %906 = vmatpush1.msra.mxu0 0.0
    %907 = vmatprep.subr.mxu0 0.0
    %908 = vmatpush1.msra.mxu0 0.0
    %909 = vmatprep.subr.mxu0 0.0
    %910 = vmatpush1.msra.mxu0 0.0
    %911 = vmatprep.subr.mxu0 0.0
    %912 = vmatpush1.msra.mxu0 0.0
    %913 = vmatprep.subr.mxu0 0.0
    %914 = vmatpush1.msra.mxu0 0.0
    %915 = vmatprep.subr.mxu0 0.0
    %916 = vmatpush1.msra.mxu0 0.0
    %917 = vmatprep.subr.mxu0 0.0
    %918 = vmatpush1.msra.mxu0 0.0
    %919 = vmatprep.subr.mxu0 0.0
    %920 = vmatpush1.msra.mxu0 0.0
    %921 = vmatprep.subr.mxu0 0.0
    %922 = vmatpush1.msra.mxu0 0.0
    %923 = vmatprep.subr.mxu0 0.0
    %924 = vmatpush1.msra.mxu0 0.0
    %925 = vmatprep.subr.mxu0 0.0
    %926 = vmatpush1.msra.mxu0 0.0
    %927 = vmatprep.subr.mxu0 0.0
    %928 = vmatpush1.msra.mxu0 0.0
    %929 = vmatprep.subr.mxu0 0.0
    %930 = vmatpush1.msra.mxu0 0.0
    %931 = vmatprep.subr.mxu0 0.0
    %932 = vmatpush1.msra.mxu0 0.0
    %933 = vmatprep.subr.mxu0 0.0
    %934 = vmatpush1.msra.mxu0 0.0
    %935 = vmatprep.subr.mxu0 0.0
    %936 = vmatpush1.msra.mxu0 0.0
    %937 = vmatprep.subr.mxu0 0.0
    %938 = vmatpush1.msra.mxu0 0.0
    %939 = vmatprep.subr.mxu0 0.0
    %940 = vmatpush1.msra.mxu0 0.0
    %941 = vmatprep.subr.mxu0 0.0
    %942 = vmatpush1.msra.mxu0 0.0
    %943 = vmatprep.subr.mxu0 0.0
    %944 = vmatpush1.msra.mxu0 0.0
    %945 = vmatprep.subr.mxu0 0.0
    %946 = vmatpush1.msra.mxu0 0.0
    %947 = vmatprep.subr.mxu0 0.0
    %948 = vmatpush1.msra.mxu0 0.0
    %949 = vmatprep.subr.mxu0 0.0
    %950 = vmatpush1.msra.mxu0 0.0
    %951 = vmatprep.subr.mxu0 0.0
    %952 = vmatpush1.msra.mxu0 0.0
    %953 = vmatprep.subr.mxu0 0.0
    %954 = vmatpush1.msra.mxu0 0.0
    %955 = vmatprep.subr.mxu0 0.0
    %956 = vmatpush1.msra.mxu0 0.0
    %957 = vmatprep.subr.mxu0 0.0
    %958 = vmatpush1.msra.mxu0 0.0
    %959 = vmatprep.subr.mxu0 0.0
    %960 = vmatpush1.msra.mxu0 0.0
    %961 = vmatprep.mubr.f32.mxu0 0.0
    %962 = vmatmul.mubr.f32.gmra.mrb[0].mxu0 %v892
    %v963 = vpop.f32.mrb[0].mxu0
    %v964 = vadd.f32 %v883, %v963
    %v965 = vpop.f32.mrb[0].mxu0
    %966 = vmatprep.mubr.f32.mxu0 0.0
    %967 = vmatmul.mubr.f32.gmra.mrb[0].mxu0 %v895
    %v968 = vpop.f32.mrb[0].mxu0
    %v969 = vadd.f32 %v888, %v968
    %v970 = vpop.f32.mrb[0].mxu0
    %971 = vdwg.mxu0
    %972 = vrot.lane.b32.xlu0 %v139, 112
    %v973 = vpop.permute.xlu0 %972
    %974 = vrot.lane.b32.xlu0 %v139, 80
    %v975 = vpop.permute.xlu0 %974
    %v976 = vsel %vm154, %v973, 0
    %v978 = vsel %vm154, %v975, 0
    %980 = vmatprep.subr.mxu0 0.0
    %981 = vmatpush1.xpose.msra.mxu0 %v978
    %982 = vmatprep.subr.mxu0 0.0
    %983 = vmatpush1.xpose.msra.mxu0 0.0
    %984 = vmatprep.subr.mxu0 0.0
    %985 = vmatpush1.xpose.msra.mxu0 0.0
    %986 = vmatprep.subr.mxu0 0.0
    %987 = vmatpush1.xpose.msra.mxu0 0.0
    %988 = vmatprep.subr.mxu0 0.0
    %989 = vmatpush1.xpose.msra.mxu0 0.0
    %990 = vmatprep.subr.mxu0 0.0
    %991 = vmatpush1.xpose.msra.mxu0 0.0
    %992 = vmatprep.subr.mxu0 0.0
    %993 = vmatpush1.xpose.msra.mxu0 0.0
    %994 = vmatprep.subr.mxu0 0.0
    %995 = vmatpush1.xpose.msra.mxu0 0.0
    %996 = vmatprep.subr.mxu0 0.0
    %997 = vmatpush1.xpose.msra.mxu0 0.0
    %998 = vmatprep.subr.mxu0 0.0
    %999 = vmatpush1.xpose.msra.mxu0 0.0
    %1000 = vmatprep.subr.mxu0 0.0
    %1001 = vmatpush1.xpose.msra.mxu0 0.0
    %1002 = vmatprep.subr.mxu0 0.0
    %1003 = vmatpush1.xpose.msra.mxu0 0.0
    %1004 = vmatprep.subr.mxu0 0.0
    %1005 = vmatpush1.xpose.msra.mxu0 0.0
    %1006 = vmatprep.subr.mxu0 0.0
    %1007 = vmatpush1.xpose.msra.mxu0 0.0
    %1008 = vmatprep.subr.mxu0 0.0
    %1009 = vmatpush1.xpose.msra.mxu0 0.0
    %1010 = vmatprep.subr.mxu0 0.0
    %1011 = vmatpush1.xpose.msra.mxu0 0.0
    %1012 = vmatprep.subr.mxu0 0.0
    %1013 = vmatpush1.xpose.msra.mxu0 0.0
    %1014 = vmatprep.subr.mxu0 0.0
    %1015 = vmatpush1.xpose.msra.mxu0 0.0
    %1016 = vmatprep.subr.mxu0 0.0
    %1017 = vmatpush1.xpose.msra.mxu0 0.0
    %1018 = vmatprep.subr.mxu0 0.0
    %1019 = vmatpush1.xpose.msra.mxu0 0.0
    %1020 = vmatprep.subr.mxu0 0.0
    %1021 = vmatpush1.xpose.msra.mxu0 0.0
    %1022 = vmatprep.subr.mxu0 0.0
    %1023 = vmatpush1.xpose.msra.mxu0 0.0
    %1024 = vmatprep.subr.mxu0 0.0
    %1025 = vmatpush1.xpose.msra.mxu0 0.0
    %1026 = vmatprep.subr.mxu0 0.0
    %1027 = vmatpush1.xpose.msra.mxu0 0.0
    %1028 = vmatprep.subr.mxu0 0.0
    %1029 = vmatpush1.xpose.msra.mxu0 0.0
    %1030 = vmatprep.subr.mxu0 0.0
    %1031 = vmatpush1.xpose.msra.mxu0 0.0
    %1032 = vmatprep.subr.mxu0 0.0
    %1033 = vmatpush1.xpose.msra.mxu0 0.0
    %1034 = vmatprep.subr.mxu0 0.0
    %1035 = vmatpush1.xpose.msra.mxu0 0.0
    %1036 = vmatprep.subr.mxu0 0.0
    %1037 = vmatpush1.xpose.msra.mxu0 0.0
    %1038 = vmatprep.subr.mxu0 0.0
    %1039 = vmatpush1.xpose.msra.mxu0 0.0
    %1040 = vmatprep.subr.mxu0 0.0
    %1041 = vmatpush1.xpose.msra.mxu0 0.0
    %1042 = vmatprep.subr.mxu0 0.0
    %1043 = vmatpush1.xpose.msra.mxu0 0.0
    %1044 = vmatprep.mubr.f32.mxu0 0.0
    %1045 = vmatmul.mubr.f32.gmra.mrb[0].mxu0 %v976
    %v1046 = vpop.f32.mrb[0].mxu0
    %v1047 = vadd.f32 0.0, %v1046
    %v1048 = vpop.f32.mrb[0].mxu0
    %1049 = vdwg.mxu0
    %1050 = vrot.lane.b32.xlu0 %v144, 112
    %v1051 = vpop.permute.xlu0 %1050
    %1052 = vrot.lane.b32.xlu0 %v144, 80
    %v1053 = vpop.permute.xlu0 %1052
    %v1054 = vsel %vm154, %v1051, 0
    %v1056 = vsel %vm154, %v1053, 0
    %1058 = vmatprep.subr.mxu0 0.0
    %1059 = vmatpush1.xpose.msra.mxu0 %v1056
    %1060 = vmatprep.subr.mxu0 0.0
    %1061 = vmatpush1.xpose.msra.mxu0 0.0
    %1062 = vmatprep.subr.mxu0 0.0
    %1063 = vmatpush1.xpose.msra.mxu0 0.0
    %1064 = vmatprep.subr.mxu0 0.0
    %1065 = vmatpush1.xpose.msra.mxu0 0.0
    %1066 = vmatprep.subr.mxu0 0.0
    %1067 = vmatpush1.xpose.msra.mxu0 0.0
    %1068 = vmatprep.subr.mxu0 0.0
    %1069 = vmatpush1.xpose.msra.mxu0 0.0
    %1070 = vmatprep.subr.mxu0 0.0
    %1071 = vmatpush1.xpose.msra.mxu0 0.0
    %1072 = vmatprep.subr.mxu0 0.0
    %1073 = vmatpush1.xpose.msra.mxu0 0.0
    %1074 = vmatprep.subr.mxu0 0.0
    %1075 = vmatpush1.xpose.msra.mxu0 0.0
    %1076 = vmatprep.subr.mxu0 0.0
    %1077 = vmatpush1.xpose.msra.mxu0 0.0
    %1078 = vmatprep.subr.mxu0 0.0
    %1079 = vmatpush1.xpose.msra.mxu0 0.0
    %1080 = vmatprep.subr.mxu0 0.0
    %1081 = vmatpush1.xpose.msra.mxu0 0.0
    %1082 = vmatprep.subr.mxu0 0.0
    %1083 = vmatpush1.xpose.msra.mxu0 0.0
    %1084 = vmatprep.subr.mxu0 0.0
    %1085 = vmatpush1.xpose.msra.mxu0 0.0
    %1086 = vmatprep.subr.mxu0 0.0
    %1087 = vmatpush1.xpose.msra.mxu0 0.0
    %1088 = vmatprep.subr.mxu0 0.0
    %1089 = vmatpush1.xpose.msra.mxu0 0.0
    %1090 = vmatprep.subr.mxu0 0.0
    %1091 = vmatpush1.xpose.msra.mxu0 0.0
    %1092 = vmatprep.subr.mxu0 0.0
    %1093 = vmatpush1.xpose.msra.mxu0 0.0
    %1094 = vmatprep.subr.mxu0 0.0
    %1095 = vmatpush1.xpose.msra.mxu0 0.0
    %1096 = vmatprep.subr.mxu0 0.0
    %1097 = vmatpush1.xpose.msra.mxu0 0.0
    %1098 = vmatprep.subr.mxu0 0.0
    %1099 = vmatpush1.xpose.msra.mxu0 0.0
    %1100 = vmatprep.subr.mxu0 0.0
    %1101 = vmatpush1.xpose.msra.mxu0 0.0
    %1102 = vmatprep.subr.mxu0 0.0
    %1103 = vmatpush1.xpose.msra.mxu0 0.0
    %1104 = vmatprep.subr.mxu0 0.0
    %1105 = vmatpush1.xpose.msra.mxu0 0.0
    %1106 = vmatprep.subr.mxu0 0.0
    %1107 = vmatpush1.xpose.msra.mxu0 0.0
    %1108 = vmatprep.subr.mxu0 0.0
    %1109 = vmatpush1.xpose.msra.mxu0 0.0
    %1110 = vmatprep.subr.mxu0 0.0
    %1111 = vmatpush1.xpose.msra.mxu0 0.0
    %1112 = vmatprep.subr.mxu0 0.0
    %1113 = vmatpush1.xpose.msra.mxu0 0.0
    %1114 = vmatprep.subr.mxu0 0.0
    %1115 = vmatpush1.xpose.msra.mxu0 0.0
    %1116 = vmatprep.subr.mxu0 0.0
    %1117 = vmatpush1.xpose.msra.mxu0 0.0
    %1118 = vmatprep.subr.mxu0 0.0
    %1119 = vmatpush1.xpose.msra.mxu0 0.0
    %1120 = vmatprep.subr.mxu0 0.0
    %1121 = vmatpush1.xpose.msra.mxu0 0.0
    %1122 = vmatprep.mubr.f32.mxu0 0.0
    %1123 = vmatmul.mubr.f32.gmra.mrb[0].mxu0 %v1054
    %v1124 = vpop.f32.mrb[0].mxu0
    %v1125 = vadd.f32 0.0, %v1124
    %v1126 = vpop.f32.mrb[0].mxu0
    %1127 = vdwg.mxu0
    %v1128 = vsel %vm154, %v1047, -inf
    %1129 = vmax.xlane.f32.xlu0 %v1128
    %v1130 = vpop.xlane.xlu0 %1129
    %v1131 = vsel %vm154, %v1125, -inf
    %1132 = vmax.xlane.f32.xlu0 %v1131
    %v1133 = vpop.xlane.xlu0 %1132
    %v1134 = vsub.f32 %v1047, %v1130
    %v1135 = vsub.f32 %v1125, %v1133
    %v1136 = vmul.f32 %v1134, 1.442695
    %v1137 = vpow.pop %v1136
    %v1138 = vmul.f32 %v1135, 1.442695
    %v1139 = vpow.pop %v1138
    %v1140 = vsel %vm154, %v1137, 0.0
    %1141 = vadd.xlane.f32.xlu0 %v1140
    %v1142 = vpop.xlane.xlu0 %1141
    %v1143 = vsel %vm154, %v1139, 0.0
    %1144 = vadd.xlane.f32.xlu0 %v1143
    %v1145 = vpop.xlane.xlu0 %1144
    %v1146 = vrcp.pop %v1142
    %v1147 = vmul.f32 %v1137, %v1146
    %v1148 = vrcp.pop %v1145
    %v1149 = vmul.f32 %v1139, %v1148
    %1150 = vrot.lane.b32.xlu0 %v139, 48
    %v1151 = vpop.permute.xlu0 %1150
    %v1154 = vsel %vm154, %v1147, 0
    %1156 = vmatprep.subr.mxu0 0.0
    %1157 = vmatpush1.msra.mxu0 %v1151
    %1158 = vmatprep.subr.mxu0 0.0
    %1159 = vmatpush1.msra.mxu0 0.0
    %1160 = vmatprep.subr.mxu0 0.0
    %1161 = vmatpush1.msra.mxu0 0.0
    %1162 = vmatprep.subr.mxu0 0.0
    %1163 = vmatpush1.msra.mxu0 0.0
    %1164 = vmatprep.subr.mxu0 0.0
    %1165 = vmatpush1.msra.mxu0 0.0
    %1166 = vmatprep.subr.mxu0 0.0
    %1167 = vmatpush1.msra.mxu0 0.0
    %1168 = vmatprep.subr.mxu0 0.0
    %1169 = vmatpush1.msra.mxu0 0.0
    %1170 = vmatprep.subr.mxu0 0.0
    %1171 = vmatpush1.msra.mxu0 0.0
    %1172 = vmatprep.subr.mxu0 0.0
    %1173 = vmatpush1.msra.mxu0 0.0
    %1174 = vmatprep.subr.mxu0 0.0
    %1175 = vmatpush1.msra.mxu0 0.0
    %1176 = vmatprep.subr.mxu0 0.0
    %1177 = vmatpush1.msra.mxu0 0.0
    %1178 = vmatprep.subr.mxu0 0.0
    %1179 = vmatpush1.msra.mxu0 0.0
    %1180 = vmatprep.subr.mxu0 0.0
    %1181 = vmatpush1.msra.mxu0 0.0
    %1182 = vmatprep.subr.mxu0 0.0
    %1183 = vmatpush1.msra.mxu0 0.0
    %1184 = vmatprep.subr.mxu0 0.0
    %1185 = vmatpush1.msra.mxu0 0.0
    %1186 = vmatprep.subr.mxu0 0.0
    %1187 = vmatpush1.msra.mxu0 0.0
    %1188 = vmatprep.subr.mxu0 0.0
    %1189 = vmatpush1.msra.mxu0 0.0
    %1190 = vmatprep.subr.mxu0 0.0
    %1191 = vmatpush1.msra.mxu0 0.0
    %1192 = vmatprep.subr.mxu0 0.0
    %1193 = vmatpush1.msra.mxu0 0.0
    %1194 = vmatprep.subr.mxu0 0.0
    %1195 = vmatpush1.msra.mxu0 0.0
    %1196 = vmatprep.subr.mxu0 0.0
    %1197 = vmatpush1.msra.mxu0 0.0
    %1198 = vmatprep.subr.mxu0 0.0
    %1199 = vmatpush1.msra.mxu0 0.0
    %1200 = vmatprep.subr.mxu0 0.0
    %1201 = vmatpush1.msra.mxu0 0.0
    %1202 = vmatprep.subr.mxu0 0.0
    %1203 = vmatpush1.msra.mxu0 0.0
    %1204 = vmatprep.subr.mxu0 0.0
    %1205 = vmatpush1.msra.mxu0 0.0
    %1206 = vmatprep.subr.mxu0 0.0
    %1207 = vmatpush1.msra.mxu0 0.0
    %1208 = vmatprep.subr.mxu0 0.0
    %1209 = vmatpush1.msra.mxu0 0.0
    %1210 = vmatprep.subr.mxu0 0.0
    %1211 = vmatpush1.msra.mxu0 0.0
    %1212 = vmatprep.subr.mxu0 0.0
    %1213 = vmatpush1.msra.mxu0 0.0
    %1214 = vmatprep.subr.mxu0 0.0
    %1215 = vmatpush1.msra.mxu0 0.0
    %1216 = vmatprep.subr.mxu0 0.0
    %1217 = vmatpush1.msra.mxu0 0.0
    %1218 = vmatprep.subr.mxu0 0.0
    %1219 = vmatpush1.msra.mxu0 0.0
    %1220 = vmatprep.mubr.f32.mxu0 0.0
    %1221 = vmatmul.mubr.f32.gmra.mrb[0].mxu0 %v1154
    %v1222 = vpop.f32.mrb[0].mxu0
    %v1223 = vadd.f32 0.0, %v1222
    %v1224 = vpop.f32.mrb[0].mxu0
    %1225 = vdwg.mxu0
    %1226 = vrot.lane.b32.xlu0 %v144, 48
    %v1227 = vpop.permute.xlu0 %1226
    %v1230 = vsel %vm154, %v1149, 0
    %1232 = vmatprep.subr.mxu0 0.0
    %1233 = vmatpush1.msra.mxu0 %v1227
    %1234 = vmatprep.subr.mxu0 0.0
    %1235 = vmatpush1.msra.mxu0 0.0
    %1236 = vmatprep.subr.mxu0 0.0
    %1237 = vmatpush1.msra.mxu0 0.0
    %1238 = vmatprep.subr.mxu0 0.0
    %1239 = vmatpush1.msra.mxu0 0.0
    %1240 = vmatprep.subr.mxu0 0.0
    %1241 = vmatpush1.msra.mxu0 0.0
    %1242 = vmatprep.subr.mxu0 0.0
    %1243 = vmatpush1.msra.mxu0 0.0
    %1244 = vmatprep.subr.mxu0 0.0
    %1245 = vmatpush1.msra.mxu0 0.0
    %1246 = vmatprep.subr.mxu0 0.0
    %1247 = vmatpush1.msra.mxu0 0.0
    %1248 = vmatprep.subr.mxu0 0.0
    %1249 = vmatpush1.msra.mxu0 0.0
    %1250 = vmatprep.subr.mxu0 0.0
    %1251 = vmatpush1.msra.mxu0 0.0
    %1252 = vmatprep.subr.mxu0 0.0
    %1253 = vmatpush1.msra.mxu0 0.0
    %1254 = vmatprep.subr.mxu0 0.0
    %1255 = vmatpush1.msra.mxu0 0.0
    %1256 = vmatprep.subr.mxu0 0.0
    %1257 = vmatpush1.msra.mxu0 0.0
    %1258 = vmatprep.subr.mxu0 0.0
    %1259 = vmatpush1.msra.mxu0 0.0
    %1260 = vmatprep.subr.mxu0 0.0
    %1261 = vmatpush1.msra.mxu0 0.0
    %1262 = vmatprep.subr.mxu0 0.0
    %1263 = vmatpush1.msra.mxu0 0.0
    %1264 = vmatprep.subr.mxu0 0.0
    %1265 = vmatpush1.msra.mxu0 0.0
    %1266 = vmatprep.subr.mxu0 0.0
    %1267 = vmatpush1.msra.mxu0 0.0
    %1268 = vmatprep.subr.mxu0 0.0
    %1269 = vmatpush1.msra.mxu0 0.0
    %1270 = vmatprep.subr.mxu0 0.0
    %1271 = vmatpush1.msra.mxu0 0.0
    %1272 = vmatprep.subr.mxu0 0.0
    %1273 = vmatpush1.msra.mxu0 0.0
    %1274 = vmatprep.subr.mxu0 0.0
    %1275 = vmatpush1.msra.mxu0 0.0
    %1276 = vmatprep.subr.mxu0 0.0
    %1277 = vmatpush1.msra.mxu0 0.0
    %1278 = vmatprep.subr.mxu0 0.0
    %1279 = vmatpush1.msra.mxu0 0.0
    %1280 = vmatprep.subr.mxu0 0.0
    %1281 = vmatpush1.msra.mxu0 0.0
    %1282 = vmatprep.subr.mxu0 0.0
    %1283 = vmatpush1.msra.mxu0 0.0
    %1284 = vmatprep.subr.mxu0 0.0
    %1285 = vmatpush1.msra.mxu0 0.0
    %1286 = vmatprep.subr.mxu0 0.0
    %1287 = vmatpush1.msra.mxu0 0.0
    %1288 = vmatprep.subr.mxu0 0.0
    %1289 = vmatpush1.msra.mxu0 0.0
    %1290 = vmatprep.subr.mxu0 0.0
    %1291 = vmatpush1.msra.mxu0 0.0
    %1292 = vmatprep.subr.mxu0 0.0
    %1293 = vmatpush1.msra.mxu0 0.0
    %1294 = vmatprep.subr.mxu0 0.0
    %1295 = vmatpush1.msra.mxu0 0.0
    %1296 = vmatprep.mubr.f32.mxu0 0.0
    %1297 = vmatmul.mubr.f32.gmra.mrb[0].mxu0 %v1230
    %v1298 = vpop.f32.mrb[0].mxu0
    %v1299 = vadd.f32 0.0, %v1298
    %v1300 = vpop.f32.mrb[0].mxu0
    %1301 = vdwg.mxu0
    %v1303 = vsel %vm154, %v1223, 0
    %v1306 = vsel %vm154, %v1299, 0
    %1308 = vmatprep.subr.mxu0 0.0
    %1309 = vmatpush1.msra.mxu0 %v149
    %1310 = vmatprep.subr.mxu0 0.0
    %1311 = vmatpush1.msra.mxu0 0.0
    %1312 = vmatprep.subr.mxu0 0.0
    %1313 = vmatpush1.msra.mxu0 0.0
    %1314 = vmatprep.subr.mxu0 0.0
    %1315 = vmatpush1.msra.mxu0 0.0
    %1316 = vmatprep.subr.mxu0 0.0
    %1317 = vmatpush1.msra.mxu0 0.0
    %1318 = vmatprep.subr.mxu0 0.0
    %1319 = vmatpush1.msra.mxu0 0.0
    %1320 = vmatprep.subr.mxu0 0.0
    %1321 = vmatpush1.msra.mxu0 0.0
    %1322 = vmatprep.subr.mxu0 0.0
    %1323 = vmatpush1.msra.mxu0 0.0
    %1324 = vmatprep.subr.mxu0 0.0
    %1325 = vmatpush1.msra.mxu0 0.0
    %1326 = vmatprep.subr.mxu0 0.0
    %1327 = vmatpush1.msra.mxu0 0.0
    %1328 = vmatprep.subr.mxu0 0.0
    %1329 = vmatpush1.msra.mxu0 0.0
    %1330 = vmatprep.subr.mxu0 0.0
    %1331 = vmatpush1.msra.mxu0 0.0
    %1332 = vmatprep.subr.mxu0 0.0
    %1333 = vmatpush1.msra.mxu0 0.0
    %1334 = vmatprep.subr.mxu0 0.0
    %1335 = vmatpush1.msra.mxu0 0.0
    %1336 = vmatprep.subr.mxu0 0.0
    %1337 = vmatpush1.msra.mxu0 0.0
    %1338 = vmatprep.subr.mxu0 0.0
    %1339 = vmatpush1.msra.mxu0 0.0
    %1340 = vmatprep.subr.mxu0 0.0
    %1341 = vmatpush1.msra.mxu0 0.0
    %1342 = vmatprep.subr.mxu0 0.0
    %1343 = vmatpush1.msra.mxu0 0.0
    %1344 = vmatprep.subr.mxu0 0.0
    %1345 = vmatpush1.msra.mxu0 0.0
    %1346 = vmatprep.subr.mxu0 0.0
    %1347 = vmatpush1.msra.mxu0 0.0
    %1348 = vmatprep.subr.mxu0 0.0
    %1349 = vmatpush1.msra.mxu0 0.0
    %1350 = vmatprep.subr.mxu0 0.0
    %1351 = vmatpush1.msra.mxu0 0.0
    %1352 = vmatprep.subr.mxu0 0.0
    %1353 = vmatpush1.msra.mxu0 0.0
    %1354 = vmatprep.subr.mxu0 0.0
    %1355 = vmatpush1.msra.mxu0 0.0
    %1356 = vmatprep.subr.mxu0 0.0
    %1357 = vmatpush1.msra.mxu0 0.0
    %1358 = vmatprep.subr.mxu0 0.0
    %1359 = vmatpush1.msra.mxu0 0.0
    %1360 = vmatprep.subr.mxu0 0.0
    %1361 = vmatpush1.msra.mxu0 0.0
    %1362 = vmatprep.subr.mxu0 0.0
    %1363 = vmatpush1.msra.mxu0 0.0
    %1364 = vmatprep.subr.mxu0 0.0
    %1365 = vmatpush1.msra.mxu0 0.0
    %1366 = vmatprep.subr.mxu0 0.0
    %1367 = vmatpush1.msra.mxu0 0.0
    %1368 = vmatprep.subr.mxu0 0.0
    %1369 = vmatpush1.msra.mxu0 0.0
    %1370 = vmatprep.subr.mxu0 0.0
    %1371 = vmatpush1.msra.mxu0 0.0
    %1372 = vmatprep.mubr.f32.mxu0 0.0
    %1373 = vmatmul.mubr.f32.gmra.mrb[0].mxu0 %v1303
    %v1374 = vpop.f32.mrb[0].mxu0
    %v1375 = vadd.f32 0.0, %v1374
    %v1376 = vpop.f32.mrb[0].mxu0
    %1377 = vmatprep.mubr.f32.mxu0 0.0
    %1378 = vmatmul.mubr.f32.gmra.mrb[0].mxu0 %v1306
    %v1379 = vpop.f32.mrb[0].mxu0
    %v1380 = vadd.f32 0.0, %v1379
    %v1381 = vpop.f32.mrb[0].mxu0
    %1382 = vdwg.mxu0
    %v1383 = vadd.f32 %v964, %v1375
    %v1384 = vadd.f32 %v969, %v1380
    %1385 = vrot.lane.b32.xlu0 %v139, 104
    %v1386 = vpop.permute.xlu0 %1385
    %1387 = vrot.lane.b32.xlu0 %v139, 72
    %v1388 = vpop.permute.xlu0 %1387
    %v1389 = vsel %vm154, %v1386, 0
    %v1391 = vsel %vm154, %v1388, 0
    %1393 = vmatprep.subr.mxu0 0.0
    %1394 = vmatpush1.xpose.msra.mxu0 %v1391
    %1395 = vmatprep.subr.mxu0 0.0
    %1396 = vmatpush1.xpose.msra.mxu0 0.0
    %1397 = vmatprep.subr.mxu0 0.0
    %1398 = vmatpush1.xpose.msra.mxu0 0.0
    %1399 = vmatprep.subr.mxu0 0.0
    %1400 = vmatpush1.xpose.msra.mxu0 0.0
    %1401 = vmatprep.subr.mxu0 0.0
    %1402 = vmatpush1.xpose.msra.mxu0 0.0
    %1403 = vmatprep.subr.mxu0 0.0
    %1404 = vmatpush1.xpose.msra.mxu0 0.0
    %1405 = vmatprep.subr.mxu0 0.0
    %1406 = vmatpush1.xpose.msra.mxu0 0.0
    %1407 = vmatprep.subr.mxu0 0.0
    %1408 = vmatpush1.xpose.msra.mxu0 0.0
    %1409 = vmatprep.subr.mxu0 0.0
    %1410 = vmatpush1.xpose.msra.mxu0 0.0
    %1411 = vmatprep.subr.mxu0 0.0
    %1412 = vmatpush1.xpose.msra.mxu0 0.0
    %1413 = vmatprep.subr.mxu0 0.0
    %1414 = vmatpush1.xpose.msra.mxu0 0.0
    %1415 = vmatprep.subr.mxu0 0.0
    %1416 = vmatpush1.xpose.msra.mxu0 0.0
    %1417 = vmatprep.subr.mxu0 0.0
    %1418 = vmatpush1.xpose.msra.mxu0 0.0
    %1419 = vmatprep.subr.mxu0 0.0
    %1420 = vmatpush1.xpose.msra.mxu0 0.0
    %1421 = vmatprep.subr.mxu0 0.0
    %1422 = vmatpush1.xpose.msra.mxu0 0.0
    %1423 = vmatprep.subr.mxu0 0.0
    %1424 = vmatpush1.xpose.msra.mxu0 0.0
    %1425 = vmatprep.subr.mxu0 0.0
    %1426 = vmatpush1.xpose.msra.mxu0 0.0
    %1427 = vmatprep.subr.mxu0 0.0
    %1428 = vmatpush1.xpose.msra.mxu0 0.0
    %1429 = vmatprep.subr.mxu0 0.0
    %1430 = vmatpush1.xpose.msra.mxu0 0.0
    %1431 = vmatprep.subr.mxu0 0.0
    %1432 = vmatpush1.xpose.msra.mxu0 0.0
    %1433 = vmatprep.subr.mxu0 0.0
    %1434 = vmatpush1.xpose.msra.mxu0 0.0
    %1435 = vmatprep.subr.mxu0 0.0
    %1436 = vmatpush1.xpose.msra.mxu0 0.0
    %1437 = vmatprep.subr.mxu0 0.0
    %1438 = vmatpush1.xpose.msra.mxu0 0.0
    %1439 = vmatprep.subr.mxu0 0.0
    %1440 = vmatpush1.xpose.msra.mxu0 0.0
    %1441 = vmatprep.subr.mxu0 0.0
    %1442 = vmatpush1.xpose.msra.mxu0 0.0
    %1443 = vmatprep.subr.mxu0 0.0
    %1444 = vmatpush1.xpose.msra.mxu0 0.0
    %1445 = vmatprep.subr.mxu0 0.0
    %1446 = vmatpush1.xpose.msra.mxu0 0.0
    %1447 = vmatprep.subr.mxu0 0.0
    %1448 = vmatpush1.xpose.msra.mxu0 0.0
    %1449 = vmatprep.subr.mxu0 0.0
    %1450 = vmatpush1.xpose.msra.mxu0 0.0
    %1451 = vmatprep.subr.mxu0 0.0
    %1452 = vmatpush1.xpose.msra.mxu0 0.0
    %1453 = vmatprep.subr.mxu0 0.0
    %1454 = vmatpush1.xpose.msra.mxu0 0.0
    %1455 = vmatprep.subr.mxu0 0.0
    %1456 = vmatpush1.xpose.msra.mxu0 0.0
    %1457 = vmatprep.mubr.f32.mxu0 0.0
    %1458 = vmatmul.mubr.f32.gmra.mrb[0].mxu0 %v1389
    %v1459 = vpop.f32.mrb[0].mxu0
    %v1460 = vadd.f32 0.0, %v1459
    %v1461 = vpop.f32.mrb[0].mxu0
    %1462 = vdwg.mxu0
    %1463 = vrot.lane.b32.xlu0 %v144, 104
    %v1464 = vpop.permute.xlu0 %1463
    %1465 = vrot.lane.b32.xlu0 %v144, 72
    %v1466 = vpop.permute.xlu0 %1465
    %v1467 = vsel %vm154, %v1464, 0
    %v1469 = vsel %vm154, %v1466, 0
    %1471 = vmatprep.subr.mxu0 0.0
    %1472 = vmatpush1.xpose.msra.mxu0 %v1469
    %1473 = vmatprep.subr.mxu0 0.0
    %1474 = vmatpush1.xpose.msra.mxu0 0.0
    %1475 = vmatprep.subr.mxu0 0.0
    %1476 = vmatpush1.xpose.msra.mxu0 0.0
    %1477 = vmatprep.subr.mxu0 0.0
    %1478 = vmatpush1.xpose.msra.mxu0 0.0
    %1479 = vmatprep.subr.mxu0 0.0
    %1480 = vmatpush1.xpose.msra.mxu0 0.0
    %1481 = vmatprep.subr.mxu0 0.0
    %1482 = vmatpush1.xpose.msra.mxu0 0.0
    %1483 = vmatprep.subr.mxu0 0.0
    %1484 = vmatpush1.xpose.msra.mxu0 0.0
    %1485 = vmatprep.subr.mxu0 0.0
    %1486 = vmatpush1.xpose.msra.mxu0 0.0
    %1487 = vmatprep.subr.mxu0 0.0
    %1488 = vmatpush1.xpose.msra.mxu0 0.0
    %1489 = vmatprep.subr.mxu0 0.0
    %1490 = vmatpush1.xpose.msra.mxu0 0.0
    %1491 = vmatprep.subr.mxu0 0.0
    %1492 = vmatpush1.xpose.msra.mxu0 0.0
    %1493 = vmatprep.subr.mxu0 0.0
    %1494 = vmatpush1.xpose.msra.mxu0 0.0
    %1495 = vmatprep.subr.mxu0 0.0
    %1496 = vmatpush1.xpose.msra.mxu0 0.0
    %1497 = vmatprep.subr.mxu0 0.0
    %1498 = vmatpush1.xpose.msra.mxu0 0.0
    %1499 = vmatprep.subr.mxu0 0.0
    %1500 = vmatpush1.xpose.msra.mxu0 0.0
    %1501 = vmatprep.subr.mxu0 0.0
    %1502 = vmatpush1.xpose.msra.mxu0 0.0
    %1503 = vmatprep.subr.mxu0 0.0
    %1504 = vmatpush1.xpose.msra.mxu0 0.0
    %1505 = vmatprep.subr.mxu0 0.0
    %1506 = vmatpush1.xpose.msra.mxu0 0.0
    %1507 = vmatprep.subr.mxu0 0.0
    %1508 = vmatpush1.xpose.msra.mxu0 0.0
    %1509 = vmatprep.subr.mxu0 0.0
    %1510 = vmatpush1.xpose.msra.mxu0 0.0
    %1511 = vmatprep.subr.mxu0 0.0
    %1512 = vmatpush1.xpose.msra.mxu0 0.0
    %1513 = vmatprep.subr.mxu0 0.0
    %1514 = vmatpush1.xpose.msra.mxu0 0.0
    %1515 = vmatprep.subr.mxu0 0.0
    %1516 = vmatpush1.xpose.msra.mxu0 0.0
    %1517 = vmatprep.subr.mxu0 0.0
    %1518 = vmatpush1.xpose.msra.mxu0 0.0
    %1519 = vmatprep.subr.mxu0 0.0
    %1520 = vmatpush1.xpose.msra.mxu0 0.0
    %1521 = vmatprep.subr.mxu0 0.0
    %1522 = vmatpush1.xpose.msra.mxu0 0.0
    %1523 = vmatprep.subr.mxu0 0.0
    %1524 = vmatpush1.xpose.msra.mxu0 0.0
    %1525 = vmatprep.subr.mxu0 0.0
    %1526 = vmatpush1.xpose.msra.mxu0 0.0
    %1527 = vmatprep.subr.mxu0 0.0
    %1528 = vmatpush1.xpose.msra.mxu0 0.0
    %1529 = vmatprep.subr.mxu0 0.0
    %1530 = vmatpush1.xpose.msra.mxu0 0.0
    %1531 = vmatprep.subr.mxu0 0.0
    %1532 = vmatpush1.xpose.msra.mxu0 0.0
    %1533 = vmatprep.subr.mxu0 0.0
    %1534 = vmatpush1.xpose.msra.mxu0 0.0
    %1535 = vmatprep.mubr.f32.mxu0 0.0
    %1536 = vmatmul.mubr.f32.gmra.mrb[0].mxu0 %v1467
    %v1537 = vpop.f32.mrb[0].mxu0
    %v1538 = vadd.f32 0.0, %v1537
    %v1539 = vpop.f32.mrb[0].mxu0
    %1540 = vdwg.mxu0
    %v1541 = vsel %vm154, %v1460, -inf
    %1542 = vmax.xlane.f32.xlu0 %v1541
    %v1543 = vpop.xlane.xlu0 %1542
    %v1544 = vsel %vm154, %v1538, -inf
    %1545 = vmax.xlane.f32.xlu0 %v1544
    %v1546 = vpop.xlane.xlu0 %1545
    %v1547 = vsub.f32 %v1460, %v1543
    %v1548 = vsub.f32 %v1538, %v1546
    %v1549 = vmul.f32 %v1547, 1.442695
    %v1550 = vpow.pop %v1549
    %v1551 = vmul.f32 %v1548, 1.442695
    %v1552 = vpow.pop %v1551
    %v1553 = vsel %vm154, %v1550, 0.0
    %1554 = vadd.xlane.f32.xlu0 %v1553
    %v1555 = vpop.xlane.xlu0 %1554
    %v1556 = vsel %vm154, %v1552, 0.0
    %1557 = vadd.xlane.f32.xlu0 %v1556
    %v1558 = vpop.xlane.xlu0 %1557
    %v1559 = vrcp.pop %v1555
    %v1560 = vmul.f32 %v1550, %v1559
    %v1561 = vrcp.pop %v1558
    %v1562 = vmul.f32 %v1552, %v1561
    %1563 = vrot.lane.b32.xlu0 %v139, 40
    %v1564 = vpop.permute.xlu0 %1563
    %v1567 = vsel %vm154, %v1560, 0
    %1569 = vmatprep.subr.mxu0 0.0
    %1570 = vmatpush1.msra.mxu0 %v1564
    %1571 = vmatprep.subr.mxu0 0.0
    %1572 = vmatpush1.msra.mxu0 0.0
    %1573 = vmatprep.subr.mxu0 0.0
    %1574 = vmatpush1.msra.mxu0 0.0
    %1575 = vmatprep.subr.mxu0 0.0
    %1576 = vmatpush1.msra.mxu0 0.0
    %1577 = vmatprep.subr.mxu0 0.0
    %1578 = vmatpush1.msra.mxu0 0.0
    %1579 = vmatprep.subr.mxu0 0.0
    %1580 = vmatpush1.msra.mxu0 0.0
    %1581 = vmatprep.subr.mxu0 0.0
    %1582 = vmatpush1.msra.mxu0 0.0
    %1583 = vmatprep.subr.mxu0 0.0
    %1584 = vmatpush1.msra.mxu0 0.0
    %1585 = vmatprep.subr.mxu0 0.0
    %1586 = vmatpush1.msra.mxu0 0.0
    %1587 = vmatprep.subr.mxu0 0.0
    %1588 = vmatpush1.msra.mxu0 0.0
    %1589 = vmatprep.subr.mxu0 0.0
    %1590 = vmatpush1.msra.mxu0 0.0
    %1591 = vmatprep.subr.mxu0 0.0
    %1592 = vmatpush1.msra.mxu0 0.0
    %1593 = vmatprep.subr.mxu0 0.0
    %1594 = vmatpush1.msra.mxu0 0.0
    %1595 = vmatprep.subr.mxu0 0.0
    %1596 = vmatpush1.msra.mxu0 0.0
    %1597 = vmatprep.subr.mxu0 0.0
    %1598 = vmatpush1.msra.mxu0 0.0
    %1599 = vmatprep.subr.mxu0 0.0
    %1600 = vmatpush1.msra.mxu0 0.0
    %1601 = vmatprep.subr.mxu0 0.0
    %1602 = vmatpush1.msra.mxu0 0.0
    %1603 = vmatprep.subr.mxu0 0.0
    %1604 = vmatpush1.msra.mxu0 0.0
    %1605 = vmatprep.subr.mxu0 0.0
    %1606 = vmatpush1.msra.mxu0 0.0
    %1607 = vmatprep.subr.mxu0 0.0
    %1608 = vmatpush1.msra.mxu0 0.0
    %1609 = vmatprep.subr.mxu0 0.0
    %1610 = vmatpush1.msra.mxu0 0.0
    %1611 = vmatprep.subr.mxu0 0.0
    %1612 = vmatpush1.msra.mxu0 0.0
    %1613 = vmatprep.subr.mxu0 0.0
    %1614 = vmatpush1.msra.mxu0 0.0
    %1615 = vmatprep.subr.mxu0 0.0
    %1616 = vmatpush1.msra.mxu0 0.0
    %1617 = vmatprep.subr.mxu0 0.0
    %1618 = vmatpush1.msra.mxu0 0.0
    %1619 = vmatprep.subr.mxu0 0.0
    %1620 = vmatpush1.msra.mxu0 0.0
    %1621 = vmatprep.subr.mxu0 0.0
    %1622 = vmatpush1.msra.mxu0 0.0
    %1623 = vmatprep.subr.mxu0 0.0
    %1624 = vmatpush1.msra.mxu0 0.0
    %1625 = vmatprep.subr.mxu0 0.0
    %1626 = vmatpush1.msra.mxu0 0.0
    %1627 = vmatprep.subr.mxu0 0.0
    %1628 = vmatpush1.msra.mxu0 0.0
    %1629 = vmatprep.subr.mxu0 0.0
    %1630 = vmatpush1.msra.mxu0 0.0
    %1631 = vmatprep.subr.mxu0 0.0
    %1632 = vmatpush1.msra.mxu0 0.0
    %1633 = vmatprep.mubr.f32.mxu0 0.0
    %1634 = vmatmul.mubr.f32.gmra.mrb[0].mxu0 %v1567
    %v1635 = vpop.f32.mrb[0].mxu0
    %v1636 = vadd.f32 0.0, %v1635
    %v1637 = vpop.f32.mrb[0].mxu0
    %1638 = vdwg.mxu0
    %1639 = vrot.lane.b32.xlu0 %v144, 40
    %v1640 = vpop.permute.xlu0 %1639
    %v1643 = vsel %vm154, %v1562, 0
    %1645 = vmatprep.subr.mxu0 0.0
    %1646 = vmatpush1.msra.mxu0 %v1640
    %1647 = vmatprep.subr.mxu0 0.0
    %1648 = vmatpush1.msra.mxu0 0.0
    %1649 = vmatprep.subr.mxu0 0.0
    %1650 = vmatpush1.msra.mxu0 0.0
    %1651 = vmatprep.subr.mxu0 0.0
    %1652 = vmatpush1.msra.mxu0 0.0
    %1653 = vmatprep.subr.mxu0 0.0
    %1654 = vmatpush1.msra.mxu0 0.0
    %1655 = vmatprep.subr.mxu0 0.0
    %1656 = vmatpush1.msra.mxu0 0.0
    %1657 = vmatprep.subr.mxu0 0.0
    %1658 = vmatpush1.msra.mxu0 0.0
    %1659 = vmatprep.subr.mxu0 0.0
    %1660 = vmatpush1.msra.mxu0 0.0
    %1661 = vmatprep.subr.mxu0 0.0
    %1662 = vmatpush1.msra.mxu0 0.0
    %1663 = vmatprep.subr.mxu0 0.0
    %1664 = vmatpush1.msra.mxu0 0.0
    %1665 = vmatprep.subr.mxu0 0.0
    %1666 = vmatpush1.msra.mxu0 0.0
    %1667 = vmatprep.subr.mxu0 0.0
    %1668 = vmatpush1.msra.mxu0 0.0
    %1669 = vmatprep.subr.mxu0 0.0
    %1670 = vmatpush1.msra.mxu0 0.0
    %1671 = vmatprep.subr.mxu0 0.0
    %1672 = vmatpush1.msra.mxu0 0.0
    %1673 = vmatprep.subr.mxu0 0.0
    %1674 = vmatpush1.msra.mxu0 0.0
    %1675 = vmatprep.subr.mxu0 0.0
    %1676 = vmatpush1.msra.mxu0 0.0
    %1677 = vmatprep.subr.mxu0 0.0
    %1678 = vmatpush1.msra.mxu0 0.0
    %1679 = vmatprep.subr.mxu0 0.0
    %1680 = vmatpush1.msra.mxu0 0.0
    %1681 = vmatprep.subr.mxu0 0.0
    %1682 = vmatpush1.msra.mxu0 0.0
    %1683 = vmatprep.subr.mxu0 0.0
    %1684 = vmatpush1.msra.mxu0 0.0
    %1685 = vmatprep.subr.mxu0 0.0
    %1686 = vmatpush1.msra.mxu0 0.0
    %1687 = vmatprep.subr.mxu0 0.0
    %1688 = vmatpush1.msra.mxu0 0.0
    %1689 = vmatprep.subr.mxu0 0.0
    %1690 = vmatpush1.msra.mxu0 0.0
    %1691 = vmatprep.subr.mxu0 0.0
    %1692 = vmatpush1.msra.mxu0 0.0
    %1693 = vmatprep.subr.mxu0 0.0
    %1694 = vmatpush1.msra.mxu0 0.0
    %1695 = vmatprep.subr.mxu0 0.0
    %1696 = vmatpush1.msra.mxu0 0.0
    %1697 = vmatprep.subr.mxu0 0.0
    %1698 = vmatpush1.msra.mxu0 0.0
    %1699 = vmatprep.subr.mxu0 0.0
    %1700 = vmatpush1.msra.mxu0 0.0
    %1701 = vmatprep.subr.mxu0 0.0
    %1702 = vmatpush1.msra.mxu0 0.0
    %1703 = vmatprep.subr.mxu0 0.0
    %1704 = vmatpush1.msra.mxu0 0.0
    %1705 = vmatprep.subr.mxu0 0.0
    %1706 = vmatpush1.msra.mxu0 0.0
    %1707 = vmatprep.subr.mxu0 0.0
    %1708 = vmatpush1.msra.mxu0 0.0
    %1709 = vmatprep.mubr.f32.mxu0 0.0
    %1710 = vmatmul.mubr.f32.gmra.mrb[0].mxu0 %v1643
    %v1711 = vpop.f32.mrb[0].mxu0
    %v1712 = vadd.f32 0.0, %v1711
    %v1713 = vpop.f32.mrb[0].mxu0
    %1714 = vdwg.mxu0
    %v1716 = vsel %vm154, %v1636, 0
    %v1719 = vsel %vm154, %v1712, 0
    %1721 = vmatprep.subr.mxu0 0.0
    %1722 = vmatpush1.msra.mxu0 %v150
    %1723 = vmatprep.subr.mxu0 0.0
    %1724 = vmatpush1.msra.mxu0 0.0
    %1725 = vmatprep.subr.mxu0 0.0
    %1726 = vmatpush1.msra.mxu0 0.0
    %1727 = vmatprep.subr.mxu0 0.0
    %1728 = vmatpush1.msra.mxu0 0.0
    %1729 = vmatprep.subr.mxu0 0.0
    %1730 = vmatpush1.msra.mxu0 0.0
    %1731 = vmatprep.subr.mxu0 0.0
    %1732 = vmatpush1.msra.mxu0 0.0
    %1733 = vmatprep.subr.mxu0 0.0
    %1734 = vmatpush1.msra.mxu0 0.0
    %1735 = vmatprep.subr.mxu0 0.0
    %1736 = vmatpush1.msra.mxu0 0.0
    %1737 = vmatprep.subr.mxu0 0.0
    %1738 = vmatpush1.msra.mxu0 0.0
    %1739 = vmatprep.subr.mxu0 0.0
    %1740 = vmatpush1.msra.mxu0 0.0
    %1741 = vmatprep.subr.mxu0 0.0
    %1742 = vmatpush1.msra.mxu0 0.0
    %1743 = vmatprep.subr.mxu0 0.0
    %1744 = vmatpush1.msra.mxu0 0.0
    %1745 = vmatprep.subr.mxu0 0.0
    %1746 = vmatpush1.msra.mxu0 0.0
    %1747 = vmatprep.subr.mxu0 0.0
    %1748 = vmatpush1.msra.mxu0 0.0
    %1749 = vmatprep.subr.mxu0 0.0
    %1750 = vmatpush1.msra.mxu0 0.0
    %1751 = vmatprep.subr.mxu0 0.0
    %1752 = vmatpush1.msra.mxu0 0.0
    %1753 = vmatprep.subr.mxu0 0.0
    %1754 = vmatpush1.msra.mxu0 0.0
    %1755 = vmatprep.subr.mxu0 0.0
    %1756 = vmatpush1.msra.mxu0 0.0
    %1757 = vmatprep.subr.mxu0 0.0
    %1758 = vmatpush1.msra.mxu0 0.0
    %1759 = vmatprep.subr.mxu0 0.0
    %1760 = vmatpush1.msra.mxu0 0.0
    %1761 = vmatprep.subr.mxu0 0.0
    %1762 = vmatpush1.msra.mxu0 0.0
    %1763 = vmatprep.subr.mxu0 0.0
    %1764 = vmatpush1.msra.mxu0 0.0
    %1765 = vmatprep.subr.mxu0 0.0
    %1766 = vmatpush1.msra.mxu0 0.0
    %1767 = vmatprep.subr.mxu0 0.0
    %1768 = vmatpush1.msra.mxu0 0.0
    %1769 = vmatprep.subr.mxu0 0.0
    %1770 = vmatpush1.msra.mxu0 0.0
    %1771 = vmatprep.subr.mxu0 0.0
    %1772 = vmatpush1.msra.mxu0 0.0
    %1773 = vmatprep.subr.mxu0 0.0
    %1774 = vmatpush1.msra.mxu0 0.0
    %1775 = vmatprep.subr.mxu0 0.0
    %1776 = vmatpush1.msra.mxu0 0.0
    %1777 = vmatprep.subr.mxu0 0.0
    %1778 = vmatpush1.msra.mxu0 0.0
    %1779 = vmatprep.subr.mxu0 0.0
    %1780 = vmatpush1.msra.mxu0 0.0
    %1781 = vmatprep.subr.mxu0 0.0
    %1782 = vmatpush1.msra.mxu0 0.0
    %1783 = vmatprep.subr.mxu0 0.0
    %1784 = vmatpush1.msra.mxu0 0.0
    %1785 = vmatprep.mubr.f32.mxu0 0.0
    %1786 = vmatmul.mubr.f32.gmra.mrb[0].mxu0 %v1716
    %v1787 = vpop.f32.mrb[0].mxu0
    %v1788 = vadd.f32 0.0, %v1787
    %v1789 = vpop.f32.mrb[0].mxu0
    %1790 = vmatprep.mubr.f32.mxu0 0.0
    %1791 = vmatmul.mubr.f32.gmra.mrb[0].mxu0 %v1719
    %v1792 = vpop.f32.mrb[0].mxu0
    %v1793 = vadd.f32 0.0, %v1792
    %v1794 = vpop.f32.mrb[0].mxu0
    %1795 = vdwg.mxu0
    %v1796 = vadd.f32 %v1383, %v1788
    %v1797 = vadd.f32 %v1384, %v1793
    %v1798 = vld [vmem:[%s3] sm:$0x1]
    %v1800 = vlaneseq
    %v1801 = vshrl.u32 %v1800, 7
    %v1802 = vsub.s32 0, %v1801
    %v1803 = vrot.slane %v1798, %v1802
    %v1805 = vadd.f32 %v1796, %v1803
    %v1806 = vadd.f32 %v1797, %v1803
    %1807 = vst.msk [vmem:[#allocation8] sm:$0xff] %vm65, %v1805
    %1808 = vst.msk [vmem:[#allocation8 + $0x8] sm:$0xff] %vm65, %v1806
    // Predicated region
    $region30: #{tpu_custom_call.1} parent=1 // pred_check
      _
    $region31: #{tpu_custom_call.1} parent=1 // pred_check_branch
      %1810 = sbr.rel (0) target = $region33
    $region32: #{tpu_custom_call.1} parent=1 // pred_region
      %s1812 = ssub.s32 256, 256
      %1813 = vsyncadd [#allocation4], %s1812
      %s1814 = sshll.u32 [#allocation8], 4
      %s1815 = int_to_ptr.vmem [resolvable:$true] %s1814
      %1820 = dma.vmem_to_hbm [thread:$0]  %s1815, 256, %s4, [#allocation4], 128, 128, 8
    $region33: #{tpu_custom_call.1} parent=1 // pred_fallthru
      _
    // Predicated region
    $region34: #{tpu_custom_call.1} parent=1 // pred_check
      _
    $region35: #{tpu_custom_call.1} parent=1 // pred_check_branch
      %1822 = sbr.rel (0) target = $region37
    $region36: #{tpu_custom_call.1} parent=1 // pred_region
      %1823 = dma.done [#allocation4], 256
    $region37: #{tpu_custom_call.1} parent=1 // pred_fallthru
      _
    %1824 = vsyncpa [#allocation3], 1
    %1825 = vsyncpa [#allocation6], 1
    %1826 = vsyncpa [#allocation4], 1

</llo_original>
